<compile_context>
chip_gen: v7x
topology: tpu7x:2x2x1
jax: 0.10.0
libtpu: 0.0.40
codegen_flags: <defaults>
</compile_context>

<pallas_src>
import math

import jax
import jax.numpy as jnp
from jax import lax
from jax.experimental import pallas as pl
from jax.experimental.pallas import tpu as pltpu

EPS = 1e-5

# MXU operand dtype for the conv matmuls.  bf16 gives ~2x MXU throughput on the
# 256-wide v6e/v7x MXUs and halves the Toeplitz-weight VMEM/DMA footprint;
# accumulation is always f32 (preferred_element_type) and the elementwise path
# (BN stats, ReLU, bias, residual) stays f32 on every generation.
MXU_DTYPE = jnp.bfloat16
_TOL = 1e-4 if MXU_DTYPE == jnp.float32 else 3e-2   # bf16 conv operands -> relaxed check


# ------------------------------ kernel ------------------------------

def _make_resblock_kernel(inv_rows, nh):
    """inv_rows = 1 / (N*H);  nh = N*H (static, for the circular up-shift)."""

    def kernel(x_ref, kd_ref, ku_ref,
               a1_ref, g1_ref, be1_ref, m1_ref, b1_ref,
               a2_ref, g2_ref, be2_ref, m2_ref, b2_ref,
               mb_ref, bb_ref, o_ref):
        x = x_ref[...]          # (NH, W*Cin_pad) f32, lane-dense: rows=(n,y), lanes=(x,c)
        kd = kd_ref[...]        # (NH, 1) 1.0 where row y-1 exists inside the same image
        ku = ku_ref[...]        # (NH, 1) 1.0 where row y+1 exists inside the same image

        def bn_relu(h, a_ref, g_ref, be_ref):
            # Training-mode BatchNorm2d with two-pass (centered) batch stats.
            # Rows are reduced before the channel-averaging matmul, so the stats
            # matmuls are (1,K)x(K,K) instead of full-slab (NH,K)x(K,K).
            row_sum = jnp.sum(h, axis=0, keepdims=True)                       # (1, K)
            mean_l = jnp.dot(row_sum, a_ref[...],
                             preferred_element_type=jnp.float32) * inv_rows   # (1, K)
            centered = h - mean_l
            sq_sum = jnp.sum(centered * centered, axis=0, keepdims=True)      # (1, K)
            var_l = jnp.dot(sq_sum, a_ref[...],
                            preferred_element_type=jnp.float32) * inv_rows    # biased var
            scale_l = g_ref[...] * lax.rsqrt(var_l + EPS)                     # (1, K)
            return jnp.maximum(centered * scale_l + be_ref[...], 0.0)

        def conv3x3(h, m_ref, b_ref):
            # 'same' 3x3 conv = 3 Toeplitz matmuls (one per kernel row dy).
            # W-direction zero padding is folded into the Toeplitz weights; the
            # H-direction halo is a sublane roll (XLU slot, circular) followed
            # by the per-image border masks (VPU) -- masks also kill the slab
            # wrap, so no cross-image / cross-slab leakage.
            hm = h.astype(MXU_DTYPE)
            r0 = jnp.dot(hm, m_ref[0], preferred_element_type=jnp.float32)
            r1 = jnp.dot(hm, m_ref[1], preferred_element_type=jnp.float32)
            r2 = jnp.dot(hm, m_ref[2], preferred_element_type=jnp.float32)
            acc = (r1
                   + pltpu.roll(r0, shift=1, axis=0) * kd         # row y <- r0[y-1]
                   + pltpu.roll(r2, shift=nh - 1, axis=0) * ku)   # row y <- r2[y+1]
            return acc + b_ref[...]                               # lane-expanded bias (1, W*Cout)

        # main branch: BN1 -> ReLU -> conv1 -> BN2 -> ReLU -> conv2
        h1 = bn_relu(x, a1_ref, g1_ref, be1_ref)
        c1 = conv3x3(h1, m1_ref, b1_ref)
        h2 = bn_relu(c1, a2_ref, g2_ref, be2_ref)
        y = conv3x3(h2, m2_ref, b2_ref)
        # bridge branch (in_channels != out_channels)
        bx = conv3x3(x, mb_ref, bb_ref)

        o_ref[...] = bx + y                                       # (NH, W*Cout): unmasked store

    return kernel


# --------------------------- wrapper glue ---------------------------

def _toeplitz_weights(w_hwio, W, dtype):
    """HWIO (3,3,Ci,Co) -> (3, W*Ci, W*Co) band matrices; 'same' W-padding folded in."""
    KH, KW, Ci, Co = w_hwio.shape
    M = jnp.zeros((KH, W * Ci, W * Co), jnp.float32)
    for xo in range(W):
        for dx in range(KW):
            xi = xo + dx - 1
            if 0 <= xi < W:
                M = M.at[:, xi * Ci:(xi + 1) * Ci, xo * Co:(xo + 1) * Co].set(
                    w_hwio[:, dx, :, :])
    return M.astype(dtype)


def _channel_avg_matrix(C, W):
    """(W*C, W*C) matrix averaging over the W positions of each channel."""
    return jnp.tile(jnp.eye(C, dtype=jnp.float32), (W, W)) / float(W)


def _border_masks(N, H):
    """(NH,1) masks: kd=1 where row y-1 exists, ku=1 where row y+1 exists (per image)."""
    r = jnp.arange(N * H)
    kd = ((r % H) != 0).astype(jnp.float32)[:, None]
    ku = ((r % H) != (H - 1)).astype(jnp.float32)[:, None]
    return kd, ku


def _padded_cin(Cin, W):
    """Smallest Cin' >= Cin with W*Cin' a multiple of 128 (skip if it would blow up)."""
    step = 128 // math.gcd(W, 128)
    c_pad = -(-Cin // step) * step
    if c_pad * W > max(2 * Cin * W, 256):     # awkward W: don't blow up lane count
        return Cin
    return c_pad


def resblock2d(x_nchw, params):
    """x_nchw: (N, Cin, H, W) float32. Returns (N, Cout, H, W)."""
    x = jnp.transpose(x_nchw, (0, 2, 3, 1)).astype(jnp.float32)   # -> NHWC (chain entry)
    N, H, W, Cin = x.shape
    Cout = params["w2"].shape[-1]
    NH = N * H

    # Pad Cin so the input slab is a full 128-lane multiple (full-K matmuls,
    # full vregs). Pad-channel conv weights are zero, so the math is exact.
    Cp = _padded_cin(Cin, W)
    if Cp != Cin:
        x = jnp.concatenate([x, jnp.zeros((N, H, W, Cp - Cin), x.dtype)], axis=-1)

    def pad_ci(w_hwio):
        if Cp == Cin:
            return w_hwio
        kh, kw, ci, co = w_hwio.shape
        return jnp.concatenate(
            [w_hwio, jnp.zeros((kh, kw, Cp - ci, co), w_hwio.dtype)], axis=2)

    g1, be1 = params["bn1_gamma"], params["bn1_beta"]
    if Cp != Cin:
        g1 = jnp.concatenate([g1, jnp.ones((Cp - Cin,), jnp.float32)])
        be1 = jnp.concatenate([be1, jnp.zeros((Cp - Cin,), jnp.float32)])

    # Lane-dense 2-D layout: rows = (n, y), lanes = (x, c).
    x2d = x.reshape(NH, W * Cp)
    kd, ku = _border_masks(N, H)
    lane = lambda v, C: jnp.tile(jnp.asarray(v, jnp.float32), W).reshape(1, W * C)

    args = (
        x2d, kd, ku,
        _channel_avg_matrix(Cp, W), lane(g1, Cp), lane(be1, Cp),
        _toeplitz_weights(pad_ci(params["w1"]), W, MXU_DTYPE), lane(params["b1"], Cout),
        _channel_avg_matrix(Cout, W),
        lane(params["bn2_gamma"], Cout), lane(params["bn2_beta"], Cout),
        _toeplitz_weights(params["w2"], W, MXU_DTYPE), lane(params["b2"], Cout),
        _toeplitz_weights(pad_ci(params["wb"]), W, MXU_DTYPE), lane(params["bb"], Cout),
    )

    K1, KO = W * Cp, W * Cout
    arg_bytes = sum(int(a.size) * a.dtype.itemsize for a in args)
    out_bytes = NH * KO * 4
    cost = pl.CostEstimate(
        flops=2 * 3 * NH * KO * (2 * K1 + KO)           # 3 convs x 3 Toeplitz matmuls
        + 4 * (K1 * K1 + KO * KO)                       # BN stats matmuls
        + 12 * NH * (K1 + KO),                          # eltwise BN/ReLU/residual
        transcendentals=K1 + KO,                        # rsqrt per lane
        bytes_accessed=arg_bytes + out_bytes)
    # VMEM limit sized from the actual footprint (+ headroom for intermediates),
    # not a blanket 32 MiB (half of v7x's 64 MiB physical).
    vmem_limit = int(min(128 << 20,
                         max(8 << 20, 4 * (arg_bytes + out_bytes) + (4 << 20))))

    out2d = pl.pallas_call(
        _make_resblock_kernel(1.0 / float(NH), NH),
        out_shape=jax.ShapeDtypeStruct((NH, KO), jnp.float32),
        in_specs=[pl.BlockSpec(memory_space=pltpu.MemorySpace.VMEM)] * len(args),
        out_specs=pl.BlockSpec(memory_space=pltpu.MemorySpace.VMEM),
        compiler_params=pltpu.CompilerParams(vmem_limit_bytes=vmem_limit),
        cost_estimate=cost,
    )(*args)

    # TODO(synk): at large N*H this single fused block should become two calls
    # (BN-stats kernel + row-tiled apply/conv kernel with a (NH/tile,) grid,
    # halo rows in the in_spec, weights resident via constant index_maps and
    # dimension_semantics=("parallel",)) so both v7x TensorCores and its 64 MiB
    # VMEM are used; the un-gridded call here targets the small shapes this
    # module is built with.  A Compose chain of these blocks should also call
    # the slab-level core directly so the NCHW<->slab transpose happens once.
    return jnp.transpose(out2d.reshape(N, H, W, Cout), (0, 3, 1, 2))   # -> NCHW (chain exit)


# ------------------------- Compose (sequential container) -------------------------

def compose(layers):
    """Equivalent of the PyTorch `Compose.forward`: thread (z, log_df_dz) through layers."""
    def forward(z, log_df_dz):
        for layer in layers:
            z, log_df_dz = layer(z, log_df_dz)
        return z, log_df_dz
    return forward


# ------------------------- parameter construction -------------------------

def make_weightnorm_conv(key, cin, cout):
    """Synthetic Conv2d(cin, cout, 3, 1, 1) with weight-norm (dim=0) folded in."""
    kv, kg, kb = jax.random.split(key, 3)
    v = jax.random.normal(kv, (cout, cin, 3, 3), jnp.float32) * 0.1       # OIHW
    g = jax.random.uniform(kg, (cout,), jnp.float32, minval=0.5, maxval=1.5)
    b = jax.random.normal(kb, (cout,), jnp.float32) * 0.1
    norm = jnp.sqrt(jnp.sum(v * v, axis=(1, 2, 3), keepdims=True))
    w = g[:, None, None, None] * v / norm                                 # weight-norm
    w_hwio = jnp.transpose(w, (2, 3, 1, 0))                               # -> HWIO
    return w_hwio, b


def make_params(key, cin, cout):
    ks = jax.random.split(key, 7)
    w1, b1 = make_weightnorm_conv(ks[0], cin, cout)
    w2, b2 = make_weightnorm_conv(ks[1], cout, cout)
    wb, bb = make_weightnorm_conv(ks[2], cin, cout)
    return dict(
        bn1_gamma=jax.random.uniform(ks[3], (cin,), jnp.float32, 0.5, 1.5),
        bn1_beta=jax.random.normal(ks[4], (cin,), jnp.float32) * 0.1,
        bn2_gamma=jax.random.uniform(ks[5], (cout,), jnp.float32, 0.5, 1.5),
        bn2_beta=jax.random.normal(ks[6], (cout,), jnp.float32) * 0.1,
        w1=w1, b1=b1, w2=w2, b2=b2, wb=wb, bb=bb,
    )


# ------------------------- pure-JAX reference -------------------------

def _bn_relu_ref(h, gamma, beta):
    mean = jnp.mean(h, axis=(0, 1, 2), keepdims=True)
    var = jnp.mean((h - mean) ** 2, axis=(0, 1, 2), keepdims=True)
    out = (h - mean) / jnp.sqrt(var + EPS) * gamma.reshape(1, 1, 1, -1) \
        + beta.reshape(1, 1, 1, -1)
    return jnp.maximum(out, 0.0)


def _conv_ref(h, w, b):
    out = lax.conv_general_dilated(h, w, (1, 1), "SAME",
                                   dimension_numbers=("NHWC", "HWIO", "NHWC"))
    return out + b.reshape(1, 1, 1, -1)


def resblock2d_ref(x_nchw, p):
    x = jnp.transpose(x_nchw, (0, 2, 3, 1)).astype(jnp.float32)
    h = _bn_relu_ref(x, p["bn1_gamma"], p["bn1_beta"])
    h = _conv_ref(h, p["w1"], p["b1"])
    h = _bn_relu_ref(h, p["bn2_gamma"], p["bn2_beta"])
    y = _conv_ref(h, p["w2"], p["b2"])
    bx = _conv_ref(x, p["wb"], p["bb"])
    return jnp.transpose(bx + y, (0, 3, 1, 2))


if __name__ == "__main__":
    key = jax.random.PRNGKey(0)
    kx, kp = jax.random.split(key)

    N, Cin, Cout, H, W = 2, 4, 8, 16, 16
    x = jax.random.normal(kx, (N, Cin, H, W), jnp.float32)
    params = make_params(kp, Cin, Cout)

    # The resblock is the conv sub-network inside the flow layers that Compose
    # chains; it leaves log_df_dz untouched.
    # TODO(synk): real flow layers (coupling etc.) also update log_df_dz.
    layer = lambda z, ldj: (resblock2d(z, params), ldj)
    flow = jax.jit(compose([layer]))

    log0 = jnp.zeros((N,), jnp.float32)
    out, ldj = flow(x, log0)
    out = jax.block_until_ready(out)
    ldj = jax.block_until_ready(ldj)

    ref = jax.block_until_ready(resblock2d_ref(x, params))

    assert out.shape == (N, Cout, H, W)
    assert ldj.shape == (N,) and bool(jnp.all(ldj == 0.0))
    max_err = float(jnp.max(jnp.abs(out - ref)))
    assert jnp.allclose(out, ref, atol=_TOL, rtol=_TOL), max_err

    print("KERNEL_OK")
</pallas_src>

<mosaic_0001>
module attributes {stable_mosaic.version = 11 : i64} {
  func.func @kernel(%arg0: memref<32x128xf32, #tpu.memory_space<vmem>>, %arg1: memref<32x1xf32, #tpu.memory_space<vmem>>, %arg2: memref<32x1xf32, #tpu.memory_space<vmem>>, %arg3: memref<128x128xf32, #tpu.memory_space<vmem>>, %arg4: memref<1x128xf32, #tpu.memory_space<vmem>>, %arg5: memref<1x128xf32, #tpu.memory_space<vmem>>, %arg6: memref<3x128x128xbf16, #tpu.memory_space<vmem>>, %arg7: memref<1x128xf32, #tpu.memory_space<vmem>>, %arg8: memref<128x128xf32, #tpu.memory_space<vmem>>, %arg9: memref<1x128xf32, #tpu.memory_space<vmem>>, %arg10: memref<1x128xf32, #tpu.memory_space<vmem>>, %arg11: memref<3x128x128xbf16, #tpu.memory_space<vmem>>, %arg12: memref<1x128xf32, #tpu.memory_space<vmem>>, %arg13: memref<3x128x128xbf16, #tpu.memory_space<vmem>>, %arg14: memref<1x128xf32, #tpu.memory_space<vmem>>, %arg15: memref<32x128xf32, #tpu.memory_space<vmem>>) attributes {dimension_semantics = [], scalar_prefetch = 0 : i64, scratch_operands = 0 : i64, tpu.core_type = #tpu.core_type<tc>} {
    %c0 = arith.constant 0 : index
    %c0_0 = arith.constant 0 : index
    %0 = vector.load %arg0[%c0, %c0_0] : memref<32x128xf32, #tpu.memory_space<vmem>>, vector<32x128xf32>
    %c0_1 = arith.constant 0 : index
    %c0_2 = arith.constant 0 : index
    %1 = vector.load %arg1[%c0_1, %c0_2] : memref<32x1xf32, #tpu.memory_space<vmem>>, vector<32x1xf32>
    %c0_3 = arith.constant 0 : index
    %c0_4 = arith.constant 0 : index
    %2 = vector.load %arg2[%c0_3, %c0_4] : memref<32x1xf32, #tpu.memory_space<vmem>>, vector<32x1xf32>
    %cst = arith.constant dense<0.000000e+00> : vector<128xf32>
    %3 = vector.multi_reduction <add>, %0, %cst [0] : vector<32x128xf32> to vector<128xf32>
    %4 = vector.shape_cast %3 : vector<128xf32> to vector<1x128xf32>
    %c0_5 = arith.constant 0 : index
    %c0_6 = arith.constant 0 : index
    %5 = vector.load %arg3[%c0_5, %c0_6] : memref<128x128xf32, #tpu.memory_space<vmem>>, vector<128x128xf32>
    %cst_7 = arith.constant dense<0.000000e+00> : vector<1x128xf32>
    %6 = tpu.matmul %4, %5, %cst_7 {dimension_numbers = #tpu.dot_dimension_numbers<[1], [0], [0], [1], [0, 0, 1, 1], [], []>} : vector<1x128xf32>, vector<128x128xf32>, vector<1x128xf32> -> vector<1x128xf32>
    %cst_8 = arith.constant 3.125000e-02 : f32
    %7 = vector.broadcast %cst_8 : f32 to vector<1x128xf32>
    %8 = arith.mulf %6, %7 : vector<1x128xf32>
    %9 = vector.broadcast %8 : vector<1x128xf32> to vector<32x128xf32>
    %10 = arith.subf %0, %9 : vector<32x128xf32>
    %11 = arith.mulf %10, %10 : vector<32x128xf32>
    %cst_9 = arith.constant dense<0.000000e+00> : vector<128xf32>
    %12 = vector.multi_reduction <add>, %11, %cst_9 [0] : vector<32x128xf32> to vector<128xf32>
    %13 = vector.shape_cast %12 : vector<128xf32> to vector<1x128xf32>
    %c0_10 = arith.constant 0 : index
    %c0_11 = arith.constant 0 : index
    %14 = vector.load %arg3[%c0_10, %c0_11] : memref<128x128xf32, #tpu.memory_space<vmem>>, vector<128x128xf32>
    %cst_12 = arith.constant dense<0.000000e+00> : vector<1x128xf32>
    %15 = tpu.matmul %13, %14, %cst_12 {dimension_numbers = #tpu.dot_dimension_numbers<[1], [0], [0], [1], [0, 0, 1, 1], [], []>} : vector<1x128xf32>, vector<128x128xf32>, vector<1x128xf32> -> vector<1x128xf32>
    %cst_13 = arith.constant 3.125000e-02 : f32
    %16 = vector.broadcast %cst_13 : f32 to vector<1x128xf32>
    %17 = arith.mulf %15, %16 : vector<1x128xf32>
    %c0_14 = arith.constant 0 : index
    %c0_15 = arith.constant 0 : index
    %18 = vector.load %arg4[%c0_14, %c0_15] : memref<1x128xf32, #tpu.memory_space<vmem>>, vector<1x128xf32>
    %cst_16 = arith.constant 9.99999974E-6 : f32
    %19 = vector.broadcast %cst_16 : f32 to vector<1x128xf32>
    %20 = arith.addf %17, %19 : vector<1x128xf32>
    %21 = math.rsqrt %20 : vector<1x128xf32>
    %22 = arith.mulf %18, %21 : vector<1x128xf32>
    %23 = vector.broadcast %22 : vector<1x128xf32> to vector<32x128xf32>
    %24 = arith.mulf %10, %23 : vector<32x128xf32>
    %c0_17 = arith.constant 0 : index
    %c0_18 = arith.constant 0 : index
    %25 = vector.load %arg5[%c0_17, %c0_18] : memref<1x128xf32, #tpu.memory_space<vmem>>, vector<1x128xf32>
    %26 = vector.broadcast %25 : vector<1x128xf32> to vector<32x128xf32>
    %27 = arith.addf %24, %26 : vector<32x128xf32>
    %cst_19 = arith.constant 0.000000e+00 : f32
    %28 = vector.broadcast %cst_19 : f32 to vector<32x128xf32>
    %29 = arith.maximumf %27, %28 : vector<32x128xf32>
    %30 = arith.truncf %29 : vector<32x128xf32> to vector<32x128xbf16>
    %c0_20 = arith.constant 0 : index
    %c0_21 = arith.constant 0 : index
    %c0_22 = arith.constant 0 : index
    %31 = vector.load %arg6[%c0_20, %c0_21, %c0_22] : memref<3x128x128xbf16, #tpu.memory_space<vmem>>, vector<1x128x128xbf16>
    %32 = vector.shape_cast %31 : vector<1x128x128xbf16> to vector<128x128xbf16>
    %cst_23 = arith.constant dense<0.000000e+00> : vector<32x128xf32>
    %33 = tpu.matmul %30, %32, %cst_23 {dimension_numbers = #tpu.dot_dimension_numbers<[1], [0], [0], [1], [0, 0, 1, 1], [], []>} : vector<32x128xbf16>, vector<128x128xbf16>, vector<32x128xf32> -> vector<32x128xf32>
    %c1 = arith.constant 1 : index
    %c0_24 = arith.constant 0 : index
    %c0_25 = arith.constant 0 : index
    %34 = vector.load %arg6[%c1, %c0_24, %c0_25] : memref<3x128x128xbf16, #tpu.memory_space<vmem>>, vector<1x128x128xbf16>
    %35 = vector.shape_cast %34 : vector<1x128x128xbf16> to vector<128x128xbf16>
    %cst_26 = arith.constant dense<0.000000e+00> : vector<32x128xf32>
    %36 = tpu.matmul %30, %35, %cst_26 {dimension_numbers = #tpu.dot_dimension_numbers<[1], [0], [0], [1], [0, 0, 1, 1], [], []>} : vector<32x128xbf16>, vector<128x128xbf16>, vector<32x128xf32> -> vector<32x128xf32>
    %c2 = arith.constant 2 : index
    %c0_27 = arith.constant 0 : index
    %c0_28 = arith.constant 0 : index
    %37 = vector.load %arg6[%c2, %c0_27, %c0_28] : memref<3x128x128xbf16, #tpu.memory_space<vmem>>, vector<1x128x128xbf16>
    %38 = vector.shape_cast %37 : vector<1x128x128xbf16> to vector<128x128xbf16>
    %cst_29 = arith.constant dense<0.000000e+00> : vector<32x128xf32>
    %39 = tpu.matmul %30, %38, %cst_29 {dimension_numbers = #tpu.dot_dimension_numbers<[1], [0], [0], [1], [0, 0, 1, 1], [], []>} : vector<32x128xbf16>, vector<128x128xbf16>, vector<32x128xf32> -> vector<32x128xf32>
    %c1_i32 = arith.constant 1 : i32
    %40 = tpu.dynamic_rotate %33 by %c1_i32 dim 0 : vector<32x128xf32>, i32 -> vector<32x128xf32>
    %41 = vector.broadcast %1 : vector<32x1xf32> to vector<32x128xf32>
    %42 = arith.mulf %40, %41 : vector<32x128xf32>
    %43 = arith.addf %36, %42 : vector<32x128xf32>
    %c31_i32 = arith.constant 31 : i32
    %44 = tpu.dynamic_rotate %39 by %c31_i32 dim 0 : vector<32x128xf32>, i32 -> vector<32x128xf32>
    %45 = vector.broadcast %2 : vector<32x1xf32> to vector<32x128xf32>
    %46 = arith.mulf %44, %45 : vector<32x128xf32>
    %47 = arith.addf %43, %46 : vector<32x128xf32>
    %c0_30 = arith.constant 0 : index
    %c0_31 = arith.constant 0 : index
    %48 = vector.load %arg7[%c0_30, %c0_31] : memref<1x128xf32, #tpu.memory_space<vmem>>, vector<1x128xf32>
    %49 = vector.broadcast %48 : vector<1x128xf32> to vector<32x128xf32>
    %50 = arith.addf %47, %49 : vector<32x128xf32>
    %cst_32 = arith.constant dense<0.000000e+00> : vector<128xf32>
    %51 = vector.multi_reduction <add>, %50, %cst_32 [0] : vector<32x128xf32> to vector<128xf32>
    %52 = vector.shape_cast %51 : vector<128xf32> to vector<1x128xf32>
    %c0_33 = arith.constant 0 : index
    %c0_34 = arith.constant 0 : index
    %53 = vector.load %arg8[%c0_33, %c0_34] : memref<128x128xf32, #tpu.memory_space<vmem>>, vector<128x128xf32>
    %cst_35 = arith.constant dense<0.000000e+00> : vector<1x128xf32>
    %54 = tpu.matmul %52, %53, %cst_35 {dimension_numbers = #tpu.dot_dimension_numbers<[1], [0], [0], [1], [0, 0, 1, 1], [], []>} : vector<1x128xf32>, vector<128x128xf32>, vector<1x128xf32> -> vector<1x128xf32>
    %cst_36 = arith.constant 3.125000e-02 : f32
    %55 = vector.broadcast %cst_36 : f32 to vector<1x128xf32>
    %56 = arith.mulf %54, %55 : vector<1x128xf32>
    %57 = vector.broadcast %56 : vector<1x128xf32> to vector<32x128xf32>
    %58 = arith.subf %50, %57 : vector<32x128xf32>
    %59 = arith.mulf %58, %58 : vector<32x128xf32>
    %cst_37 = arith.constant dense<0.000000e+00> : vector<128xf32>
    %60 = vector.multi_reduction <add>, %59, %cst_37 [0] : vector<32x128xf32> to vector<128xf32>
    %61 = vector.shape_cast %60 : vector<128xf32> to vector<1x128xf32>
    %c0_38 = arith.constant 0 : index
    %c0_39 = arith.constant 0 : index
    %62 = vector.load %arg8[%c0_38, %c0_39] : memref<128x128xf32, #tpu.memory_space<vmem>>, vector<128x128xf32>
    %cst_40 = arith.constant dense<0.000000e+00> : vector<1x128xf32>
    %63 = tpu.matmul %61, %62, %cst_40 {dimension_numbers = #tpu.dot_dimension_numbers<[1], [0], [0], [1], [0, 0, 1, 1], [], []>} : vector<1x128xf32>, vector<128x128xf32>, vector<1x128xf32> -> vector<1x128xf32>
    %cst_41 = arith.constant 3.125000e-02 : f32
    %64 = vector.broadcast %cst_41 : f32 to vector<1x128xf32>
    %65 = arith.mulf %63, %64 : vector<1x128xf32>
    %c0_42 = arith.constant 0 : index
    %c0_43 = arith.constant 0 : index
    %66 = vector.load %arg9[%c0_42, %c0_43] : memref<1x128xf32, #tpu.memory_space<vmem>>, vector<1x128xf32>
    %cst_44 = arith.constant 9.99999974E-6 : f32
    %67 = vector.broadcast %cst_44 : f32 to vector<1x128xf32>
    %68 = arith.addf %65, %67 : vector<1x128xf32>
    %69 = math.rsqrt %68 : vector<1x128xf32>
    %70 = arith.mulf %66, %69 : vector<1x128xf32>
    %71 = vector.broadcast %70 : vector<1x128xf32> to vector<32x128xf32>
    %72 = arith.mulf %58, %71 : vector<32x128xf32>
    %c0_45 = arith.constant 0 : index
    %c0_46 = arith.constant 0 : index
    %73 = vector.load %arg10[%c0_45, %c0_46] : memref<1x128xf32, #tpu.memory_space<vmem>>, vector<1x128xf32>
    %74 = vector.broadcast %73 : vector<1x128xf32> to vector<32x128xf32>
    %75 = arith.addf %72, %74 : vector<32x128xf32>
    %cst_47 = arith.constant 0.000000e+00 : f32
    %76 = vector.broadcast %cst_47 : f32 to vector<32x128xf32>
    %77 = arith.maximumf %75, %76 : vector<32x128xf32>
    %78 = arith.truncf %77 : vector<32x128xf32> to vector<32x128xbf16>
    %c0_48 = arith.constant 0 : index
    %c0_49 = arith.constant 0 : index
    %c0_50 = arith.constant 0 : index
    %79 = vector.load %arg11[%c0_48, %c0_49, %c0_50] : memref<3x128x128xbf16, #tpu.memory_space<vmem>>, vector<1x128x128xbf16>
    %80 = vector.shape_cast %79 : vector<1x128x128xbf16> to vector<128x128xbf16>
    %cst_51 = arith.constant dense<0.000000e+00> : vector<32x128xf32>
    %81 = tpu.matmul %78, %80, %cst_51 {dimension_numbers = #tpu.dot_dimension_numbers<[1], [0], [0], [1], [0, 0, 1, 1], [], []>} : vector<32x128xbf16>, vector<128x128xbf16>, vector<32x128xf32> -> vector<32x128xf32>
    %c1_52 = arith.constant 1 : index
    %c0_53 = arith.constant 0 : index
    %c0_54 = arith.constant 0 : index
    %82 = vector.load %arg11[%c1_52, %c0_53, %c0_54] : memref<3x128x128xbf16, #tpu.memory_space<vmem>>, vector<1x128x128xbf16>
    %83 = vector.shape_cast %82 : vector<1x128x128xbf16> to vector<128x128xbf16>
    %cst_55 = arith.constant dense<0.000000e+00> : vector<32x128xf32>
    %84 = tpu.matmul %78, %83, %cst_55 {dimension_numbers = #tpu.dot_dimension_numbers<[1], [0], [0], [1], [0, 0, 1, 1], [], []>} : vector<32x128xbf16>, vector<128x128xbf16>, vector<32x128xf32> -> vector<32x128xf32>
    %c2_56 = arith.constant 2 : index
    %c0_57 = arith.constant 0 : index
    %c0_58 = arith.constant 0 : index
    %85 = vector.load %arg11[%c2_56, %c0_57, %c0_58] : memref<3x128x128xbf16, #tpu.memory_space<vmem>>, vector<1x128x128xbf16>
    %86 = vector.shape_cast %85 : vector<1x128x128xbf16> to vector<128x128xbf16>
    %cst_59 = arith.constant dense<0.000000e+00> : vector<32x128xf32>
    %87 = tpu.matmul %78, %86, %cst_59 {dimension_numbers = #tpu.dot_dimension_numbers<[1], [0], [0], [1], [0, 0, 1, 1], [], []>} : vector<32x128xbf16>, vector<128x128xbf16>, vector<32x128xf32> -> vector<32x128xf32>
    %c1_i32_60 = arith.constant 1 : i32
    %88 = tpu.dynamic_rotate %81 by %c1_i32_60 dim 0 : vector<32x128xf32>, i32 -> vector<32x128xf32>
    %89 = vector.broadcast %1 : vector<32x1xf32> to vector<32x128xf32>
    %90 = arith.mulf %88, %89 : vector<32x128xf32>
    %91 = arith.addf %84, %90 : vector<32x128xf32>
    %c31_i32_61 = arith.constant 31 : i32
    %92 = tpu.dynamic_rotate %87 by %c31_i32_61 dim 0 : vector<32x128xf32>, i32 -> vector<32x128xf32>
    %93 = vector.broadcast %2 : vector<32x1xf32> to vector<32x128xf32>
    %94 = arith.mulf %92, %93 : vector<32x128xf32>
    %95 = arith.addf %91, %94 : vector<32x128xf32>
    %c0_62 = arith.constant 0 : index
    %c0_63 = arith.constant 0 : index
    %96 = vector.load %arg12[%c0_62, %c0_63] : memref<1x128xf32, #tpu.memory_space<vmem>>, vector<1x128xf32>
    %97 = vector.broadcast %96 : vector<1x128xf32> to vector<32x128xf32>
    %98 = arith.addf %95, %97 : vector<32x128xf32>
    %99 = arith.truncf %0 : vector<32x128xf32> to vector<32x128xbf16>
    %c0_64 = arith.constant 0 : index
    %c0_65 = arith.constant 0 : index
    %c0_66 = arith.constant 0 : index
    %100 = vector.load %arg13[%c0_64, %c0_65, %c0_66] : memref<3x128x128xbf16, #tpu.memory_space<vmem>>, vector<1x128x128xbf16>
    %101 = vector.shape_cast %100 : vector<1x128x128xbf16> to vector<128x128xbf16>
    %cst_67 = arith.constant dense<0.000000e+00> : vector<32x128xf32>
    %102 = tpu.matmul %99, %101, %cst_67 {dimension_numbers = #tpu.dot_dimension_numbers<[1], [0], [0], [1], [0, 0, 1, 1], [], []>} : vector<32x128xbf16>, vector<128x128xbf16>, vector<32x128xf32> -> vector<32x128xf32>
    %c1_68 = arith.constant 1 : index
    %c0_69 = arith.constant 0 : index
    %c0_70 = arith.constant 0 : index
    %103 = vector.load %arg13[%c1_68, %c0_69, %c0_70] : memref<3x128x128xbf16, #tpu.memory_space<vmem>>, vector<1x128x128xbf16>
    %104 = vector.shape_cast %103 : vector<1x128x128xbf16> to vector<128x128xbf16>
    %cst_71 = arith.constant dense<0.000000e+00> : vector<32x128xf32>
    %105 = tpu.matmul %99, %104, %cst_71 {dimension_numbers = #tpu.dot_dimension_numbers<[1], [0], [0], [1], [0, 0, 1, 1], [], []>} : vector<32x128xbf16>, vector<128x128xbf16>, vector<32x128xf32> -> vector<32x128xf32>
    %c2_72 = arith.constant 2 : index
    %c0_73 = arith.constant 0 : index
    %c0_74 = arith.constant 0 : index
    %106 = vector.load %arg13[%c2_72, %c0_73, %c0_74] : memref<3x128x128xbf16, #tpu.memory_space<vmem>>, vector<1x128x128xbf16>
    %107 = vector.shape_cast %106 : vector<1x128x128xbf16> to vector<128x128xbf16>
    %cst_75 = arith.constant dense<0.000000e+00> : vector<32x128xf32>
    %108 = tpu.matmul %99, %107, %cst_75 {dimension_numbers = #tpu.dot_dimension_numbers<[1], [0], [0], [1], [0, 0, 1, 1], [], []>} : vector<32x128xbf16>, vector<128x128xbf16>, vector<32x128xf32> -> vector<32x128xf32>
    %c1_i32_76 = arith.constant 1 : i32
    %109 = tpu.dynamic_rotate %102 by %c1_i32_76 dim 0 : vector<32x128xf32>, i32 -> vector<32x128xf32>
    %110 = vector.broadcast %1 : vector<32x1xf32> to vector<32x128xf32>
    %111 = arith.mulf %109, %110 : vector<32x128xf32>
    %112 = arith.addf %105, %111 : vector<32x128xf32>
    %c31_i32_77 = arith.constant 31 : i32
    %113 = tpu.dynamic_rotate %108 by %c31_i32_77 dim 0 : vector<32x128xf32>, i32 -> vector<32x128xf32>
    %114 = vector.broadcast %2 : vector<32x1xf32> to vector<32x128xf32>
    %115 = arith.mulf %113, %114 : vector<32x128xf32>
    %116 = arith.addf %112, %115 : vector<32x128xf32>
    %c0_78 = arith.constant 0 : index
    %c0_79 = arith.constant 0 : index
    %117 = vector.load %arg14[%c0_78, %c0_79] : memref<1x128xf32, #tpu.memory_space<vmem>>, vector<1x128xf32>
    %118 = vector.broadcast %117 : vector<1x128xf32> to vector<32x128xf32>
    %119 = arith.addf %116, %118 : vector<32x128xf32>
    %120 = arith.addf %119, %98 : vector<32x128xf32>
    %c0_80 = arith.constant 0 : index
    %c0_81 = arith.constant 0 : index
    %121 = vector.load %arg15[%c0_80, %c0_81] : memref<32x128xf32, #tpu.memory_space<vmem>>, vector<32x128xf32>
    tpu.vector_store %arg15[%c0_80, %c0_81], %120 {strides = array<i32>} : memref<32x128xf32, #tpu.memory_space<vmem>>, vector<32x128xf32>,
    return
  }
}

</mosaic_0001>

<llo_original>
// kernel: tile.45
$region0: #{tile.45}
  #allocation0 [shape = 's32[1]{0}', space=sflag, size = 0x4, scoped, tag = 'scoped memory for tile.45']
  %s0 = inlined_call_operand.vmem [shape: f32[8], index: 0, kind: input, shape index: {}]
  %s1 = inlined_call_operand.vmem [shape: f32[16,8], index: 1, kind: output, shape index: {}]
  // Predicated region
  $region2: #{tile.45} parent=0 // pred_check
    _
  $region3: #{tile.45} parent=0 // pred_check_branch
    %3 = sbr.rel (0) target = $region5
  $region4: #{tile.45} parent=0 // pred_region
    _
  $region5: #{tile.45} parent=0 // pred_fallthru
    _
  %v4 = vld [vmem:[%s0] ss:$0 sm:$0xff]
  %5 = vst [vmem:[%s1] sm:$0xff] %v4
  %s6 = scalar_lea.vmem %s1, 8
  %7 = vst [vmem:[%s6] sm:$0xff] %v4

// kernel: tile.46
$region0: #{tile.46}
  %s0 = inlined_call_operand.vmem [shape: f32[16,8], index: 0, kind: input, shape index: {}]
  %s1 = inlined_call_operand.vmem [shape: f32[1,128], index: 1, kind: output, shape index: {}]
  $region1: #{tile.46} parent=0
    #allocation0 [shape = 'u8[4096]{0}', space=vmem, size = 0x1000, scoped, tag = 'scoped mem for output reshape']
    %v2 = vld [vmem:[%s0] sm:$0x1]
    %vm3 = vcmask 64512
    %4 = vst.msk [vmem:[#allocation0] sm:$0x1] %vm3, %v2
    %s5 = scalar_lea.vmem %s0, 15
    %v6 = vld [vmem:[%s5] sm:$0x1]
    %7 = vrot.lane.b32.xlu0 %v6, 120
    %v8 = vpop.permute.xlu0 %7
    %vm9 = vcmask 1048512
    %10 = vst.msk [vmem:[#allocation0] sm:$0x1] %vm9, %v8
    %s11 = scalar_lea.vmem %s0, 14
    %v12 = vld [vmem:[%s11] sm:$0x1]
    %13 = vrot.lane.b32.xlu0 %v12, 112
    %v14 = vpop.permute.xlu0 %13
    %vm15 = vcmask 982912
    %16 = vst.msk [vmem:[#allocation0] sm:$0x1] %vm15, %v14
    %s17 = scalar_lea.vmem %s0, 13
    %v18 = vld [vmem:[%s17] sm:$0x1]
    %19 = vrot.lane.b32.xlu0 %v18, 104
    %v20 = vpop.permute.xlu0 %19
    %vm21 = vcmask 917312
    %22 = vst.msk [vmem:[#allocation0] sm:$0x1] %vm21, %v20
    %s23 = scalar_lea.vmem %s0, 12
    %v24 = vld [vmem:[%s23] sm:$0x1]
    %25 = vrot.lane.b32.xlu0 %v24, 96
    %v26 = vpop.permute.xlu0 %25
    %vm27 = vcmask 851712
    %28 = vst.msk [vmem:[#allocation0] sm:$0x1] %vm27, %v26
    %s29 = scalar_lea.vmem %s0, 11
    %v30 = vld [vmem:[%s29] sm:$0x1]
    %31 = vrot.lane.b32.xlu0 %v30, 88
    %v32 = vpop.permute.xlu0 %31
    %vm33 = vcmask 786112
    %34 = vst.msk [vmem:[#allocation0] sm:$0x1] %vm33, %v32
    %s35 = scalar_lea.vmem %s0, 10
    %v36 = vld [vmem:[%s35] sm:$0x1]
    %37 = vrot.lane.b32.xlu0 %v36, 80
    %v38 = vpop.permute.xlu0 %37
    %vm39 = vcmask 720512
    %40 = vst.msk [vmem:[#allocation0] sm:$0x1] %vm39, %v38
    %s41 = scalar_lea.vmem %s0, 9
    %v42 = vld [vmem:[%s41] sm:$0x1]
    %43 = vrot.lane.b32.xlu0 %v42, 72
    %v44 = vpop.permute.xlu0 %43
    %vm45 = vcmask 654912
    %46 = vst.msk [vmem:[#allocation0] sm:$0x1] %vm45, %v44
    %s47 = scalar_lea.vmem %s0, 8
    %v48 = vld [vmem:[%s47] sm:$0x1]
    %49 = vrot.lane.b32.xlu0 %v48, 64
    %v50 = vpop.permute.xlu0 %49
    %vm51 = vcmask 589312
    %52 = vst.msk [vmem:[#allocation0] sm:$0x1] %vm51, %v50
    %s53 = scalar_lea.vmem %s0, 7
    %v54 = vld [vmem:[%s53] sm:$0x1]
    %55 = vrot.lane.b32.xlu0 %v54, 56
    %v56 = vpop.permute.xlu0 %55
    %vm57 = vcmask 523712
    %58 = vst.msk [vmem:[#allocation0] sm:$0x1] %vm57, %v56
    %s59 = scalar_lea.vmem %s0, 6
    %v60 = vld [vmem:[%s59] sm:$0x1]
    %61 = vrot.lane.b32.xlu0 %v60, 48
    %v62 = vpop.permute.xlu0 %61
    %vm63 = vcmask 458112
    %64 = vst.msk [vmem:[#allocation0] sm:$0x1] %vm63, %v62
    %s65 = scalar_lea.vmem %s0, 5
    %v66 = vld [vmem:[%s65] sm:$0x1]
    %67 = vrot.lane.b32.xlu0 %v66, 40
    %v68 = vpop.permute.xlu0 %67
    %vm69 = vcmask 392512
    %70 = vst.msk [vmem:[#allocation0] sm:$0x1] %vm69, %v68
    %s71 = scalar_lea.vmem %s0, 4
    %v72 = vld [vmem:[%s71] sm:$0x1]
    %73 = vrot.lane.b32.xlu0 %v72, 32
    %v74 = vpop.permute.xlu0 %73
    %vm75 = vcmask 326912
    %76 = vst.msk [vmem:[#allocation0] sm:$0x1] %vm75, %v74
    %s77 = scalar_lea.vmem %s0, 3
    %v78 = vld [vmem:[%s77] sm:$0x1]
    %79 = vrot.lane.b32.xlu0 %v78, 24
    %v80 = vpop.permute.xlu0 %79
    %vm81 = vcmask 261312
    %82 = vst.msk [vmem:[#allocation0] sm:$0x1] %vm81, %v80
    %s83 = scalar_lea.vmem %s0, 2
    %v84 = vld [vmem:[%s83] sm:$0x1]
    %85 = vrot.lane.b32.xlu0 %v84, 16
    %v86 = vpop.permute.xlu0 %85
    %vm87 = vcmask 195712
    %88 = vst.msk [vmem:[#allocation0] sm:$0x1] %vm87, %v86
    %s89 = scalar_lea.vmem %s0, 1
    %v90 = vld [vmem:[%s89] sm:$0x1]
    %91 = vrot.lane.b32.xlu0 %v90, 8
    %v92 = vpop.permute.xlu0 %91
    %vm93 = vcmask 130112
    %94 = vst.msk [vmem:[#allocation0] sm:$0x1] %vm93, %v92
    %s96 = sshllo.u32 0, 1
    %v98 = vld [vmem:[#allocation0] sm:%s96]
    %s99 = sshllo.u32 0, 1
    %100 = vst [vmem:[%s1] sm:%s99] %v98

// kernel: forward.1
$region0: #{forward.1}
  #allocation0 [shape = 'u32[]', space=smem, size = 0x4, offset = 0x4, fixed_abs, tag = 'smem constant byte address 0x4 - core index']
  #allocation1 [shape = 'u32[144,128]{1,0:T(1,128)}', space=vmem, size = 0x12000, scoped, tag = 'internal scratch']
  %s0 = inlined_call_operand.vmem [shape: f32[32,128], index: 0, kind: input, shape index: {}]
  %s1 = inlined_call_operand.vmem [shape: f32[32,1], index: 1, kind: input, shape index: {}]
  %s2 = inlined_call_operand.vmem [shape: f32[32,1], index: 2, kind: input, shape index: {}]
  %s3 = inlined_call_operand.vmem [shape: f32[128,128], index: 3, kind: input, shape index: {}, may-alias: {3,8}]
  %s4 = inlined_call_operand.vmem [shape: f32[1,128], index: 4, kind: input, shape index: {}]
  %s5 = inlined_call_operand.vmem [shape: f32[1,128], index: 5, kind: input, shape index: {}]
  %s6 = inlined_call_operand.vmem [shape: bf16[3,128,128], index: 6, kind: input, shape index: {}]
  %s7 = inlined_call_operand.vmem [shape: f32[1,128], index: 7, kind: input, shape index: {}]
  %s8 = inlined_call_operand.vmem [shape: f32[128,128], index: 8, kind: input, shape index: {}, may-alias: {3,8}]
  %s9 = inlined_call_operand.vmem [shape: f32[1,128], index: 9, kind: input, shape index: {}]
  %s10 = inlined_call_operand.vmem [shape: f32[1,128], index: 10, kind: input, shape index: {}]
  %s11 = inlined_call_operand.vmem [shape: bf16[3,128,128], index: 11, kind: input, shape index: {}]
  %s12 = inlined_call_operand.vmem [shape: f32[1,128], index: 12, kind: input, shape index: {}]
  %s13 = inlined_call_operand.vmem [shape: bf16[3,128,128], index: 13, kind: input, shape index: {}]
  %s14 = inlined_call_operand.vmem [shape: f32[1,128], index: 14, kind: input, shape index: {}]
  %s15 = inlined_call_operand.vmem [shape: f32[32,128], index: 15, kind: output, shape index: {}]
  %s16 = sld [smem:[#allocation0]]
  $region70: #{forward.1} parent=0
    _
  %s18 = ssub.s32 1, %s16
  %s19 = scalar_select 0, %s18, %s16
  // Predicated region
  $region2: #{forward.1} parent=0 // pred_check
    _
  $region3: #{forward.1} parent=0 // pred_check_branch
    %21 = sbr.rel (0) target = $region5
  $region4: #{forward.1} parent=0 // pred_region
    _
  $region5: #{forward.1} parent=0 // pred_fallthru
    _
  // Predicated region
  $region6: #{forward.1} parent=0 // pred_check
    _
  $region7: #{forward.1} parent=0 // pred_check_branch
    %23 = sbr.rel (0) target = $region9
  $region8: #{forward.1} parent=0 // pred_region
    _
  $region9: #{forward.1} parent=0 // pred_fallthru
    _
  // Predicated region
  $region10: #{forward.1} parent=0 // pred_check
    _
  $region11: #{forward.1} parent=0 // pred_check_branch
    %25 = sbr.rel (0) target = $region13
  $region12: #{forward.1} parent=0 // pred_region
    _
  $region13: #{forward.1} parent=0 // pred_fallthru
    _
  // Predicated region
  $region14: #{forward.1} parent=0 // pred_check
    _
  $region15: #{forward.1} parent=0 // pred_check_branch
    %27 = sbr.rel (0) target = $region17
  $region16: #{forward.1} parent=0 // pred_region
    _
  $region17: #{forward.1} parent=0 // pred_fallthru
    _
  // Predicated region
  $region18: #{forward.1} parent=0 // pred_check
    _
  $region19: #{forward.1} parent=0 // pred_check_branch
    %29 = sbr.rel (0) target = $region21
  $region20: #{forward.1} parent=0 // pred_region
    _
  $region21: #{forward.1} parent=0 // pred_fallthru
    _
  // Predicated region
  $region22: #{forward.1} parent=0 // pred_check
    _
  $region23: #{forward.1} parent=0 // pred_check_branch
    %31 = sbr.rel (0) target = $region25
  $region24: #{forward.1} parent=0 // pred_region
    _
  $region25: #{forward.1} parent=0 // pred_fallthru
    _
  // Predicated region
  $region26: #{forward.1} parent=0 // pred_check
    _
  $region27: #{forward.1} parent=0 // pred_check_branch
    %33 = sbr.rel (0) target = $region29
  $region28: #{forward.1} parent=0 // pred_region
    _
  $region29: #{forward.1} parent=0 // pred_fallthru
    _
  // Predicated region
  $region30: #{forward.1} parent=0 // pred_check
    _
  $region31: #{forward.1} parent=0 // pred_check_branch
    %35 = sbr.rel (0) target = $region33
  $region32: #{forward.1} parent=0 // pred_region
    _
  $region33: #{forward.1} parent=0 // pred_fallthru
    _
  // Predicated region
  $region34: #{forward.1} parent=0 // pred_check
    _
  $region35: #{forward.1} parent=0 // pred_check_branch
    %37 = sbr.rel (0) target = $region37
  $region36: #{forward.1} parent=0 // pred_region
    _
  $region37: #{forward.1} parent=0 // pred_fallthru
    _
  // Predicated region
  $region38: #{forward.1} parent=0 // pred_check
    _
  $region39: #{forward.1} parent=0 // pred_check_branch
    %39 = sbr.rel (0) target = $region41
  $region40: #{forward.1} parent=0 // pred_region
    _
  $region41: #{forward.1} parent=0 // pred_fallthru
    _
  // Predicated region
  $region42: #{forward.1} parent=0 // pred_check
    _
  $region43: #{forward.1} parent=0 // pred_check_branch
    %41 = sbr.rel (0) target = $region45
  $region44: #{forward.1} parent=0 // pred_region
    _
  $region45: #{forward.1} parent=0 // pred_fallthru
    _
  // Predicated region
  $region46: #{forward.1} parent=0 // pred_check
    _
  $region47: #{forward.1} parent=0 // pred_check_branch
    %43 = sbr.rel (0) target = $region49
  $region48: #{forward.1} parent=0 // pred_region
    _
  $region49: #{forward.1} parent=0 // pred_fallthru
    _
  // Predicated region
  $region50: #{forward.1} parent=0 // pred_check
    _
  $region51: #{forward.1} parent=0 // pred_check_branch
    %45 = sbr.rel (0) target = $region53
  $region52: #{forward.1} parent=0 // pred_region
    _
  $region53: #{forward.1} parent=0 // pred_fallthru
    _
  // Predicated region
  $region54: #{forward.1} parent=0 // pred_check
    _
  $region55: #{forward.1} parent=0 // pred_check_branch
    %47 = sbr.rel (0) target = $region57
  $region56: #{forward.1} parent=0 // pred_region
    _
  $region57: #{forward.1} parent=0 // pred_fallthru
    _
  // Predicated region
  $region58: #{forward.1} parent=0 // pred_check
    _
  $region59: #{forward.1} parent=0 // pred_check_branch
    %49 = sbr.rel (0) target = $region61
  $region60: #{forward.1} parent=0 // pred_region
    _
  $region61: #{forward.1} parent=0 // pred_fallthru
    _
  %v51 = vld [vmem:[%s0] sm:$0xff]
  %v52 = vld [vmem:[%s0 + $0x8] sm:$0xff]
  %v53 = vld [vmem:[%s0 + $0x10] sm:$0xff]
  %v54 = vld [vmem:[%s0 + $0x18] sm:$0xff]
  %v55 = vld [vmem:[%s1] sm:$0xff]
  %v56 = vld [vmem:[%s1 + $0x8] sm:$0xff]
  %v57 = vld [vmem:[%s1 + $0x10] sm:$0xff]
  %v58 = vld [vmem:[%s1 + $0x18] sm:$0xff]
  %v59 = vld [vmem:[%s2] sm:$0xff]
  %v60 = vld [vmem:[%s2 + $0x8] sm:$0xff]
  %v61 = vld [vmem:[%s2 + $0x10] sm:$0xff]
  %v62 = vld [vmem:[%s2 + $0x18] sm:$0xff]
  %v63 = vadd.f32 %v51, %v52
  %v64 = vadd.f32 %v63, %v53
  %v65 = vadd.f32 %v64, %v54
  %v66 = vrot.slane %v65, 4
  %v67 = vadd.f32 %v65, %v66
  %v68 = vrot.slane %v67, 2
  %v69 = vadd.f32 %v67, %v68
  %v70 = vrot.slane %v69, 1
  %v71 = vadd.f32 %v69, %v70
  %v72 = vld [vmem:[%s3] sm:$0xff]
  %v73 = vld [vmem:[%s3 + $0x8] sm:$0xff]
  %v74 = vld [vmem:[%s3 + $0x10] sm:$0xff]
  %v75 = vld [vmem:[%s3 + $0x18] sm:$0xff]
  %v76 = vld [vmem:[%s3 + $0x20] sm:$0xff]
  %v77 = vld [vmem:[%s3 + $0x28] sm:$0xff]
  %v78 = vld [vmem:[%s3 + $0x30] sm:$0xff]
  %v79 = vld [vmem:[%s3 + $0x38] sm:$0xff]
  %v80 = vld [vmem:[%s3 + $0x40] sm:$0xff]
  %v81 = vld [vmem:[%s3 + $0x48] sm:$0xff]
  %v82 = vld [vmem:[%s3 + $0x50] sm:$0xff]
  %v83 = vld [vmem:[%s3 + $0x58] sm:$0xff]
  %v84 = vld [vmem:[%s3 + $0x60] sm:$0xff]
  %v85 = vld [vmem:[%s3 + $0x68] sm:$0xff]
  %v86 = vld [vmem:[%s3 + $0x70] sm:$0xff]
  %v87 = vld [vmem:[%s3 + $0x78] sm:$0xff]
  %88 = vmatprep.subr.mxu0 0.0
  %89 = vmatpush1.msra.mxu0 %v72
  %90 = vmatprep.subr.mxu0 0.0
  %91 = vmatpush1.msra.mxu0 %v73
  %92 = vmatprep.subr.mxu0 0.0
  %93 = vmatpush1.msra.mxu0 %v74
  %94 = vmatprep.subr.mxu0 0.0
  %95 = vmatpush1.msra.mxu0 %v75
  %96 = vmatprep.subr.mxu0 0.0
  %97 = vmatpush1.msra.mxu0 %v76
  %98 = vmatprep.subr.mxu0 0.0
  %99 = vmatpush1.msra.mxu0 %v77
  %100 = vmatprep.subr.mxu0 0.0
  %101 = vmatpush1.msra.mxu0 %v78
  %102 = vmatprep.subr.mxu0 0.0
  %103 = vmatpush1.msra.mxu0 %v79
  %104 = vmatprep.subr.mxu0 0.0
  %105 = vmatpush1.msra.mxu0 %v80
  %106 = vmatprep.subr.mxu0 0.0
  %107 = vmatpush1.msra.mxu0 %v81
  %108 = vmatprep.subr.mxu0 0.0
  %109 = vmatpush1.msra.mxu0 %v82
  %110 = vmatprep.subr.mxu0 0.0
  %111 = vmatpush1.msra.mxu0 %v83
  %112 = vmatprep.subr.mxu0 0.0
  %113 = vmatpush1.msra.mxu0 %v84
  %114 = vmatprep.subr.mxu0 0.0
  %115 = vmatpush1.msra.mxu0 %v85
  %116 = vmatprep.subr.mxu0 0.0
  %117 = vmatpush1.msra.mxu0 %v86
  %118 = vmatprep.subr.mxu0 0.0
  %119 = vmatpush1.msra.mxu0 %v87
  %120 = vmatprep.subr.mxu0 0.0
  %121 = vmatpush1.msra.mxu0 0.0
  %122 = vmatprep.subr.mxu0 0.0
  %123 = vmatpush1.msra.mxu0 0.0
  %124 = vmatprep.subr.mxu0 0.0
  %125 = vmatpush1.msra.mxu0 0.0
  %126 = vmatprep.subr.mxu0 0.0
  %127 = vmatpush1.msra.mxu0 0.0
  %128 = vmatprep.subr.mxu0 0.0
  %129 = vmatpush1.msra.mxu0 0.0
  %130 = vmatprep.subr.mxu0 0.0
  %131 = vmatpush1.msra.mxu0 0.0
  %132 = vmatprep.subr.mxu0 0.0
  %133 = vmatpush1.msra.mxu0 0.0
  %134 = vmatprep.subr.mxu0 0.0
  %135 = vmatpush1.msra.mxu0 0.0
  %136 = vmatprep.subr.mxu0 0.0
  %137 = vmatpush1.msra.mxu0 0.0
  %138 = vmatprep.subr.mxu0 0.0
  %139 = vmatpush1.msra.mxu0 0.0
  %140 = vmatprep.subr.mxu0 0.0
  %141 = vmatpush1.msra.mxu0 0.0
  %142 = vmatprep.subr.mxu0 0.0
  %143 = vmatpush1.msra.mxu0 0.0
  %144 = vmatprep.subr.mxu0 0.0
  %145 = vmatpush1.msra.mxu0 0.0
  %146 = vmatprep.subr.mxu0 0.0
  %147 = vmatpush1.msra.mxu0 0.0
  %148 = vmatprep.subr.mxu0 0.0
  %149 = vmatpush1.msra.mxu0 0.0
  %150 = vmatprep.subr.mxu0 0.0
  %151 = vmatpush1.msra.mxu0 0.0
  %152 = vmatprep.mubr.f32.mxu0 0.0
  %153 = vmatmul.mubr.f32.gmra.mrb[0].mxu0 %v71
  %v154 = vpop.f32.mrb[0].mxu0
  %v155 = vadd.f32 0.0, %v154
  %v156 = vpop.f32.mrb[0].mxu0
  %157 = vdwg.mxu0
  %v158 = vmul.f32 %v155, 0.03125
  %v159 = vlaneseq
  %v160 = vshrl.u32 %v159, 7
  %v161 = vsub.s32 0, %v160
  %v162 = vrot.slane %v158, %v161
  %v163 = vsub.f32 %v51, %v162
  %v164 = vsub.f32 %v52, %v162
  %v165 = vsub.f32 %v53, %v162
  %v166 = vsub.f32 %v54, %v162
  %v167 = vmul.f32 %v163, %v163
  %v168 = vmul.f32 %v164, %v164
  %v169 = vmul.f32 %v165, %v165
  %v170 = vmul.f32 %v166, %v166
  %v171 = vadd.f32 %v167, %v168
  %v172 = vadd.f32 %v171, %v169
  %v173 = vadd.f32 %v172, %v170
  %v174 = vrot.slane %v173, 4
  %v175 = vadd.f32 %v173, %v174
  %v176 = vrot.slane %v175, 2
  %v177 = vadd.f32 %v175, %v176
  %v178 = vrot.slane %v177, 1
  %v179 = vadd.f32 %v177, %v178
  %180 = vmatprep.subr.mxu0 0.0
  %181 = vmatpush1.msra.mxu0 %v72
  %182 = vmatprep.subr.mxu0 0.0
  %183 = vmatpush1.msra.mxu0 %v73
  %184 = vmatprep.subr.mxu0 0.0
  %185 = vmatpush1.msra.mxu0 %v74
  %186 = vmatprep.subr.mxu0 0.0
  %187 = vmatpush1.msra.mxu0 %v75
  %188 = vmatprep.subr.mxu0 0.0
  %189 = vmatpush1.msra.mxu0 %v76
  %190 = vmatprep.subr.mxu0 0.0
  %191 = vmatpush1.msra.mxu0 %v77
  %192 = vmatprep.subr.mxu0 0.0
  %193 = vmatpush1.msra.mxu0 %v78
  %194 = vmatprep.subr.mxu0 0.0
  %195 = vmatpush1.msra.mxu0 %v79
  %196 = vmatprep.subr.mxu0 0.0
  %197 = vmatpush1.msra.mxu0 %v80
  %198 = vmatprep.subr.mxu0 0.0
  %199 = vmatpush1.msra.mxu0 %v81
  %200 = vmatprep.subr.mxu0 0.0
  %201 = vmatpush1.msra.mxu0 %v82
  %202 = vmatprep.subr.mxu0 0.0
  %203 = vmatpush1.msra.mxu0 %v83
  %204 = vmatprep.subr.mxu0 0.0
  %205 = vmatpush1.msra.mxu0 %v84
  %206 = vmatprep.subr.mxu0 0.0
  %207 = vmatpush1.msra.mxu0 %v85
  %208 = vmatprep.subr.mxu0 0.0
  %209 = vmatpush1.msra.mxu0 %v86
  %210 = vmatprep.subr.mxu0 0.0
  %211 = vmatpush1.msra.mxu0 %v87
  %212 = vmatprep.subr.mxu0 0.0
  %213 = vmatpush1.msra.mxu0 0.0
  %214 = vmatprep.subr.mxu0 0.0
  %215 = vmatpush1.msra.mxu0 0.0
  %216 = vmatprep.subr.mxu0 0.0
  %217 = vmatpush1.msra.mxu0 0.0
  %218 = vmatprep.subr.mxu0 0.0
  %219 = vmatpush1.msra.mxu0 0.0
  %220 = vmatprep.subr.mxu0 0.0
  %221 = vmatpush1.msra.mxu0 0.0
  %222 = vmatprep.subr.mxu0 0.0
  %223 = vmatpush1.msra.mxu0 0.0
  %224 = vmatprep.subr.mxu0 0.0
  %225 = vmatpush1.msra.mxu0 0.0
  %226 = vmatprep.subr.mxu0 0.0
  %227 = vmatpush1.msra.mxu0 0.0
  %228 = vmatprep.subr.mxu0 0.0
  %229 = vmatpush1.msra.mxu0 0.0
  %230 = vmatprep.subr.mxu0 0.0
  %231 = vmatpush1.msra.mxu0 0.0
  %232 = vmatprep.subr.mxu0 0.0
  %233 = vmatpush1.msra.mxu0 0.0
  %234 = vmatprep.subr.mxu0 0.0
  %235 = vmatpush1.msra.mxu0 0.0
  %236 = vmatprep.subr.mxu0 0.0
  %237 = vmatpush1.msra.mxu0 0.0
  %238 = vmatprep.subr.mxu0 0.0
  %239 = vmatpush1.msra.mxu0 0.0
  %240 = vmatprep.subr.mxu0 0.0
  %241 = vmatpush1.msra.mxu0 0.0
  %242 = vmatprep.subr.mxu0 0.0
  %243 = vmatpush1.msra.mxu0 0.0
  %244 = vmatprep.mubr.f32.mxu0 0.0
  %245 = vmatmul.mubr.f32.gmra.mrb[0].mxu0 %v179
  %v246 = vpop.f32.mrb[0].mxu0
  %v247 = vadd.f32 0.0, %v246
  %v248 = vpop.f32.mrb[0].mxu0
  %249 = vdwg.mxu0
  %v250 = vmul.f32 %v247, 0.03125
  %v251 = vld [vmem:[%s4] sm:$0x1]
  %v252 = vadd.f32 %v250, 1e-05
  %v253 = vrsqrt.pop %v252
  %v254 = vmul.f32 %v251, %v253
  %v256 = vlaneseq
  %v257 = vshrl.u32 %v256, 7
  %v258 = vsub.s32 0, %v257
  %v259 = vrot.slane %v254, %v258
  %v261 = vmul.f32 %v163, %v259
  %v262 = vmul.f32 %v164, %v259
  %v263 = vmul.f32 %v165, %v259
  %v264 = vmul.f32 %v166, %v259
  %v265 = vld [vmem:[%s5] sm:$0x1]
  %v267 = vlaneseq
  %v268 = vshrl.u32 %v267, 7
  %v269 = vsub.s32 0, %v268
  %v270 = vrot.slane %v265, %v269
  %v272 = vadd.f32 %v261, %v270
  %v273 = vadd.f32 %v262, %v270
  %v274 = vadd.f32 %v263, %v270
  %v275 = vadd.f32 %v264, %v270
  %v276 = vmax.f32 %v272, 0.0
  %v277 = vmax.f32 %v273, 0.0
  %v278 = vmax.f32 %v274, 0.0
  %v279 = vmax.f32 %v275, 0.0
  %v280 = vpack.c.bf16 %v277, %v276
  %v281 = vpack.c.bf16 %v279, %v278
  %v282 = vld [vmem:[%s6] sm:$0xf]
  %v283 = vld [vmem:[%s6 + $0x4] sm:$0xf]
  %v284 = vld [vmem:[%s6 + $0x8] sm:$0xf]
  %v285 = vld [vmem:[%s6 + $0xc] sm:$0xf]
  %v286 = vld [vmem:[%s6 + $0x10] sm:$0xf]
  %v287 = vld [vmem:[%s6 + $0x14] sm:$0xf]
  %v288 = vld [vmem:[%s6 + $0x18] sm:$0xf]
  %v289 = vld [vmem:[%s6 + $0x1c] sm:$0xf]
  %v290 = vld [vmem:[%s6 + $0x20] sm:$0xf]
  %v291 = vld [vmem:[%s6 + $0x24] sm:$0xf]
  %v292 = vld [vmem:[%s6 + $0x28] sm:$0xf]
  %v293 = vld [vmem:[%s6 + $0x2c] sm:$0xf]
  %v294 = vld [vmem:[%s6 + $0x30] sm:$0xf]
  %v295 = vld [vmem:[%s6 + $0x34] sm:$0xf]
  %v296 = vld [vmem:[%s6 + $0x38] sm:$0xf]
  %v297 = vld [vmem:[%s6 + $0x3c] sm:$0xf]
  %v314 = vunpack.c.l.b16 %v282
  %v315 = vunpack.c.l.b16 %v283
  %v316 = vunpack.c.l.b16 %v284
  %v317 = vunpack.c.l.b16 %v285
  %v318 = vunpack.c.l.b16 %v286
  %v319 = vunpack.c.l.b16 %v287
  %v320 = vunpack.c.l.b16 %v288
  %v321 = vunpack.c.l.b16 %v289
  %v322 = vunpack.c.l.b16 %v290
  %v323 = vunpack.c.l.b16 %v291
  %v324 = vunpack.c.l.b16 %v292
  %v325 = vunpack.c.l.b16 %v293
  %v326 = vunpack.c.l.b16 %v294
  %v327 = vunpack.c.l.b16 %v295
  %v328 = vunpack.c.l.b16 %v296
  %v329 = vunpack.c.l.b16 %v297
  %v330 = vpack.c.b16 %v315, %v314
  %v331 = vpack.c.b16 %v317, %v316
  %v332 = vpack.c.b16 %v319, %v318
  %v333 = vpack.c.b16 %v321, %v320
  %v334 = vpack.c.b16 %v323, %v322
  %v335 = vpack.c.b16 %v325, %v324
  %v336 = vpack.c.b16 %v327, %v326
  %v337 = vpack.c.b16 %v329, %v328
  %346 = vmatprep.subr.bf16.mxu0 0
  %347 = vmatpush1.bf16.msra.mxu0 %v330
  %348 = vmatprep.subr.bf16.mxu0 0
  %349 = vmatpush1.bf16.msra.mxu0 %v331
  %350 = vmatprep.subr.bf16.mxu0 0
  %351 = vmatpush1.bf16.msra.mxu0 %v332
  %352 = vmatprep.subr.bf16.mxu0 0
  %353 = vmatpush1.bf16.msra.mxu0 %v333
  %354 = vmatprep.subr.bf16.mxu0 0
  %355 = vmatpush1.bf16.msra.mxu0 %v334
  %356 = vmatprep.subr.bf16.mxu0 0
  %357 = vmatpush1.bf16.msra.mxu0 %v335
  %358 = vmatprep.subr.bf16.mxu0 0
  %359 = vmatpush1.bf16.msra.mxu0 %v336
  %360 = vmatprep.subr.bf16.mxu0 0
  %361 = vmatpush1.bf16.msra.mxu0 %v337
  %362 = vmatprep.subr.bf16.mxu0 0
  %363 = vmatpush1.bf16.msra.mxu0 0
  %364 = vmatprep.subr.bf16.mxu0 0
  %365 = vmatpush1.bf16.msra.mxu0 0
  %366 = vmatprep.subr.bf16.mxu0 0
  %367 = vmatpush1.bf16.msra.mxu0 0
  %368 = vmatprep.subr.bf16.mxu0 0
  %369 = vmatpush1.bf16.msra.mxu0 0
  %370 = vmatprep.subr.bf16.mxu0 0
  %371 = vmatpush1.bf16.msra.mxu0 0
  %372 = vmatprep.subr.bf16.mxu0 0
  %373 = vmatpush1.bf16.msra.mxu0 0
  %374 = vmatprep.subr.bf16.mxu0 0
  %375 = vmatpush1.bf16.msra.mxu0 0
  %376 = vmatprep.subr.bf16.mxu0 0
  %377 = vmatpush1.bf16.msra.mxu0 0
  %378 = vmatprep.mubr.bf16.mxu0 0
  %379 = vmatmul.mubr.bf16.gmra.mrb[0].mxu0 %v280
  %v380 = vpop.f32.mrb[0].mxu0
  %v381 = vadd.f32 0.0, %v380
  %v382 = vpop.f32.mrb[0].mxu0
  %v383 = vpop.f32.mrb[0].mxu0
  %v384 = vadd.f32 0.0, %v383
  %v385 = vpop.f32.mrb[0].mxu0
  %386 = vmatprep.mubr.bf16.mxu0 0
  %387 = vmatmul.mubr.bf16.gmra.mrb[0].mxu0 %v281
  %v388 = vpop.f32.mrb[0].mxu0
  %v389 = vadd.f32 0.0, %v388
  %v390 = vpop.f32.mrb[0].mxu0
  %v391 = vpop.f32.mrb[0].mxu0
  %v392 = vadd.f32 0.0, %v391
  %v393 = vpop.f32.mrb[0].mxu0
  %394 = vdwg.mxu0
  %s395 = scalar_lea.vmem %s6, 64
  %v396 = vld [vmem:[%s395] sm:$0xf]
  %v397 = vld [vmem:[%s395 + $0x4] sm:$0xf]
  %v398 = vld [vmem:[%s395 + $0x8] sm:$0xf]
  %v399 = vld [vmem:[%s395 + $0xc] sm:$0xf]
  %v400 = vld [vmem:[%s395 + $0x10] sm:$0xf]
  %v401 = vld [vmem:[%s395 + $0x14] sm:$0xf]
  %v402 = vld [vmem:[%s395 + $0x18] sm:$0xf]
  %v403 = vld [vmem:[%s395 + $0x1c] sm:$0xf]
  %v404 = vld [vmem:[%s395 + $0x20] sm:$0xf]
  %v405 = vld [vmem:[%s395 + $0x24] sm:$0xf]
  %v406 = vld [vmem:[%s395 + $0x28] sm:$0xf]
  %v407 = vld [vmem:[%s395 + $0x2c] sm:$0xf]
  %v408 = vld [vmem:[%s395 + $0x30] sm:$0xf]
  %v409 = vld [vmem:[%s395 + $0x34] sm:$0xf]
  %v410 = vld [vmem:[%s395 + $0x38] sm:$0xf]
  %v411 = vld [vmem:[%s395 + $0x3c] sm:$0xf]
  %s412 = scalar_lea.vmem %s6, 128
  %v413 = vld [vmem:[%s412] sm:$0xf]
  %v414 = vld [vmem:[%s412 + $0x4] sm:$0xf]
  %v415 = vld [vmem:[%s412 + $0x8] sm:$0xf]
  %v416 = vld [vmem:[%s412 + $0xc] sm:$0xf]
  %v417 = vld [vmem:[%s412 + $0x10] sm:$0xf]
  %v418 = vld [vmem:[%s412 + $0x14] sm:$0xf]
  %v419 = vld [vmem:[%s412 + $0x18] sm:$0xf]
  %v420 = vld [vmem:[%s412 + $0x1c] sm:$0xf]
  %v421 = vld [vmem:[%s412 + $0x20] sm:$0xf]
  %v422 = vld [vmem:[%s412 + $0x24] sm:$0xf]
  %v423 = vld [vmem:[%s412 + $0x28] sm:$0xf]
  %v424 = vld [vmem:[%s412 + $0x2c] sm:$0xf]
  %v425 = vld [vmem:[%s412 + $0x30] sm:$0xf]
  %v426 = vld [vmem:[%s412 + $0x34] sm:$0xf]
  %v427 = vld [vmem:[%s412 + $0x38] sm:$0xf]
  %v428 = vld [vmem:[%s412 + $0x3c] sm:$0xf]
  %v445 = vunpack.c.l.b16 %v413
  %v446 = vunpack.c.l.b16 %v414
  %v447 = vunpack.c.l.b16 %v415
  %v448 = vunpack.c.l.b16 %v416
  %v449 = vunpack.c.l.b16 %v417
  %v450 = vunpack.c.l.b16 %v418
  %v451 = vunpack.c.l.b16 %v419
  %v452 = vunpack.c.l.b16 %v420
  %v453 = vunpack.c.l.b16 %v421
  %v454 = vunpack.c.l.b16 %v422
  %v455 = vunpack.c.l.b16 %v423
  %v456 = vunpack.c.l.b16 %v424
  %v457 = vunpack.c.l.b16 %v425
  %v458 = vunpack.c.l.b16 %v426
  %v459 = vunpack.c.l.b16 %v427
  %v460 = vunpack.c.l.b16 %v428
  %v461 = vpack.c.b16 %v446, %v445
  %v462 = vpack.c.b16 %v448, %v447
  %v463 = vpack.c.b16 %v450, %v449
  %v464 = vpack.c.b16 %v452, %v451
  %v465 = vpack.c.b16 %v454, %v453
  %v466 = vpack.c.b16 %v456, %v455
  %v467 = vpack.c.b16 %v458, %v457
  %v468 = vpack.c.b16 %v460, %v459
  %477 = vmatprep.subr.bf16.mxu0 0
  %478 = vmatpush1.bf16.msra.mxu0 %v461
  %479 = vmatprep.subr.bf16.mxu0 0
  %480 = vmatpush1.bf16.msra.mxu0 %v462
  %481 = vmatprep.subr.bf16.mxu0 0
  %482 = vmatpush1.bf16.msra.mxu0 %v463
  %483 = vmatprep.subr.bf16.mxu0 0
  %484 = vmatpush1.bf16.msra.mxu0 %v464
  %485 = vmatprep.subr.bf16.mxu0 0
  %486 = vmatpush1.bf16.msra.mxu0 %v465
  %487 = vmatprep.subr.bf16.mxu0 0
  %488 = vmatpush1.bf16.msra.mxu0 %v466
  %489 = vmatprep.subr.bf16.mxu0 0
  %490 = vmatpush1.bf16.msra.mxu0 %v467
  %491 = vmatprep.subr.bf16.mxu0 0
  %492 = vmatpush1.bf16.msra.mxu0 %v468
  %493 = vmatprep.subr.bf16.mxu0 0
  %494 = vmatpush1.bf16.msra.mxu0 0
  %495 = vmatprep.subr.bf16.mxu0 0
  %496 = vmatpush1.bf16.msra.mxu0 0
  %497 = vmatprep.subr.bf16.mxu0 0
  %498 = vmatpush1.bf16.msra.mxu0 0
  %499 = vmatprep.subr.bf16.mxu0 0
  %500 = vmatpush1.bf16.msra.mxu0 0
  %501 = vmatprep.subr.bf16.mxu0 0
  %502 = vmatpush1.bf16.msra.mxu0 0
  %503 = vmatprep.subr.bf16.mxu0 0
  %504 = vmatpush1.bf16.msra.mxu0 0
  %505 = vmatprep.subr.bf16.mxu0 0
  %506 = vmatpush1.bf16.msra.mxu0 0
  %507 = vmatprep.subr.bf16.mxu0 0
  %508 = vmatpush1.bf16.msra.mxu0 0
  %509 = vmatprep.mubr.bf16.mxu0 0
  %510 = vmatmul.mubr.bf16.gmra.mrb[0].mxu0 %v280
  %v511 = vpop.f32.mrb[0].mxu0
  %v512 = vadd.f32 0.0, %v511
  %v513 = vpop.f32.mrb[0].mxu0
  %v514 = vpop.f32.mrb[0].mxu0
  %v515 = vadd.f32 0.0, %v514
  %v516 = vpop.f32.mrb[0].mxu0
  %517 = vmatprep.mubr.bf16.mxu0 0
  %518 = vmatmul.mubr.bf16.gmra.mrb[0].mxu0 %v281
  %v519 = vpop.f32.mrb[0].mxu0
  %v520 = vadd.f32 0.0, %v519
  %v521 = vpop.f32.mrb[0].mxu0
  %v522 = vpop.f32.mrb[0].mxu0
  %v523 = vadd.f32 0.0, %v522
  %v524 = vpop.f32.mrb[0].mxu0
  %525 = vdwg.mxu0
  %v526 = vrot.slane %v381, 7
  %v527 = vrot.slane %v384, 7
  %v528 = vrot.slane %v389, 7
  %v529 = vrot.slane %v392, 7
  %v530 = vlaneseq
  %v531 = vshrl.u32 %v530, 7
  %vm532 = vcmp.lt.s32.totalorder %v531, 1
  %v533 = vsel %vm532, %v528, %v529
  %v534 = vsel %vm532, %v527, %v528
  %v535 = vsel %vm532, %v526, %v527
  %v536 = vsel %vm532, %v529, %v526
  %538 = vset.pattern.permute.xlu0 0
  %539 = vperm.xlu0 %538, %v55
  %v540 = vpop.permute.xlu0 %539
  %543 = vset.pattern.permute.xlu0 0
  %544 = vperm.xlu0 %543, %v56
  %v545 = vpop.permute.xlu0 %544
  %548 = vset.pattern.permute.xlu0 0
  %549 = vperm.xlu0 %548, %v57
  %v550 = vpop.permute.xlu0 %549
  %553 = vset.pattern.permute.xlu0 0
  %554 = vperm.xlu0 %553, %v58
  %v555 = vpop.permute.xlu0 %554
  %v557 = vmul.f32 %v536, %v540
  %v558 = vmul.f32 %v535, %v545
  %v559 = vmul.f32 %v534, %v550
  %v560 = vmul.f32 %v533, %v555
  %v577 = vunpack.c.l.b16 %v396
  %v578 = vunpack.c.l.b16 %v397
  %v579 = vunpack.c.l.b16 %v398
  %v580 = vunpack.c.l.b16 %v399
  %v581 = vunpack.c.l.b16 %v400
  %v582 = vunpack.c.l.b16 %v401
  %v583 = vunpack.c.l.b16 %v402
  %v584 = vunpack.c.l.b16 %v403
  %v585 = vunpack.c.l.b16 %v404
  %v586 = vunpack.c.l.b16 %v405
  %v587 = vunpack.c.l.b16 %v406
  %v588 = vunpack.c.l.b16 %v407
  %v589 = vunpack.c.l.b16 %v408
  %v590 = vunpack.c.l.b16 %v409
  %v591 = vunpack.c.l.b16 %v410
  %v592 = vunpack.c.l.b16 %v411
  %v593 = vpack.c.b16 %v578, %v577
  %v594 = vpack.c.b16 %v580, %v579
  %v595 = vpack.c.b16 %v582, %v581
  %v596 = vpack.c.b16 %v584, %v583
  %v597 = vpack.c.b16 %v586, %v585
  %v598 = vpack.c.b16 %v588, %v587
  %v599 = vpack.c.b16 %v590, %v589
  %v600 = vpack.c.b16 %v592, %v591
  %609 = vmatprep.subr.bf16.mxu0 0
  %610 = vmatpush1.bf16.msra.mxu0 %v593
  %611 = vmatprep.subr.bf16.mxu0 0
  %612 = vmatpush1.bf16.msra.mxu0 %v594
  %613 = vmatprep.subr.bf16.mxu0 0
  %614 = vmatpush1.bf16.msra.mxu0 %v595
  %615 = vmatprep.subr.bf16.mxu0 0
  %616 = vmatpush1.bf16.msra.mxu0 %v596
  %617 = vmatprep.subr.bf16.mxu0 0
  %618 = vmatpush1.bf16.msra.mxu0 %v597
  %619 = vmatprep.subr.bf16.mxu0 0
  %620 = vmatpush1.bf16.msra.mxu0 %v598
  %621 = vmatprep.subr.bf16.mxu0 0
  %622 = vmatpush1.bf16.msra.mxu0 %v599
  %623 = vmatprep.subr.bf16.mxu0 0
  %624 = vmatpush1.bf16.msra.mxu0 %v600
  %625 = vmatprep.subr.bf16.mxu0 0
  %626 = vmatpush1.bf16.msra.mxu0 0
  %627 = vmatprep.subr.bf16.mxu0 0
  %628 = vmatpush1.bf16.msra.mxu0 0
  %629 = vmatprep.subr.bf16.mxu0 0
  %630 = vmatpush1.bf16.msra.mxu0 0
  %631 = vmatprep.subr.bf16.mxu0 0
  %632 = vmatpush1.bf16.msra.mxu0 0
  %633 = vmatprep.subr.bf16.mxu0 0
  %634 = vmatpush1.bf16.msra.mxu0 0
  %635 = vmatprep.subr.bf16.mxu0 0
  %636 = vmatpush1.bf16.msra.mxu0 0
  %637 = vmatprep.subr.bf16.mxu0 0
  %638 = vmatpush1.bf16.msra.mxu0 0
  %639 = vmatprep.subr.bf16.mxu0 0
  %640 = vmatpush1.bf16.msra.mxu0 0
  %641 = vmatprep.mubr.bf16.mxu0 0
  %642 = vmatmul.mubr.bf16.gmra.mrb[0].mxu0 %v280
  %v643 = vpop.f32.mrb[0].mxu0
  %v644 = vadd.f32 %v557, %v643
  %v645 = vpop.f32.mrb[0].mxu0
  %v646 = vpop.f32.mrb[0].mxu0
  %v647 = vadd.f32 %v558, %v646
  %v648 = vpop.f32.mrb[0].mxu0
  %649 = vmatprep.mubr.bf16.mxu0 0
  %650 = vmatmul.mubr.bf16.gmra.mrb[0].mxu0 %v281
  %v651 = vpop.f32.mrb[0].mxu0
  %v652 = vadd.f32 %v559, %v651
  %v653 = vpop.f32.mrb[0].mxu0
  %v654 = vpop.f32.mrb[0].mxu0
  %v655 = vadd.f32 %v560, %v654
  %v656 = vpop.f32.mrb[0].mxu0
  %657 = vdwg.mxu0
  %v658 = vrot.slane %v512, 1
  %v659 = vrot.slane %v515, 1
  %v660 = vrot.slane %v520, 1
  %v661 = vrot.slane %v523, 1
  %vm662 = vcmp.lt.s32.totalorder %v531, 7
  %v663 = vsel %vm662, %v660, %v661
  %v664 = vsel %vm662, %v659, %v660
  %v665 = vsel %vm662, %v658, %v659
  %v666 = vsel %vm662, %v661, %v658
  %668 = vset.pattern.permute.xlu0 0
  %669 = vperm.xlu0 %668, %v59
  %v670 = vpop.permute.xlu0 %669
  %673 = vset.pattern.permute.xlu0 0
  %674 = vperm.xlu0 %673, %v60
  %v675 = vpop.permute.xlu0 %674
  %678 = vset.pattern.permute.xlu0 0
  %679 = vperm.xlu0 %678, %v61
  %v680 = vpop.permute.xlu0 %679
  %683 = vset.pattern.permute.xlu0 0
  %684 = vperm.xlu0 %683, %v62
  %v685 = vpop.permute.xlu0 %684
  %v687 = vmul.f32 %v665, %v670
  %v688 = vmul.f32 %v664, %v675
  %v689 = vmul.f32 %v663, %v680
  %v690 = vmul.f32 %v666, %v685
  %v691 = vadd.f32 %v644, %v687
  %v692 = vadd.f32 %v647, %v688
  %v693 = vadd.f32 %v652, %v689
  %v694 = vadd.f32 %v655, %v690
  %v695 = vld [vmem:[%s7] sm:$0x1]
  %v697 = vlaneseq
  %v698 = vshrl.u32 %v697, 7
  %v699 = vsub.s32 0, %v698
  %v700 = vrot.slane %v695, %v699
  %v702 = vadd.f32 %v691, %v700
  %v703 = vadd.f32 %v692, %v700
  %v704 = vadd.f32 %v693, %v700
  %v705 = vadd.f32 %v694, %v700
  %v706 = vadd.f32 %v702, %v703
  %v707 = vadd.f32 %v706, %v704
  %v708 = vadd.f32 %v707, %v705
  %v709 = vrot.slane %v708, 4
  %v710 = vadd.f32 %v708, %v709
  %v711 = vrot.slane %v710, 2
  %v712 = vadd.f32 %v710, %v711
  %v713 = vrot.slane %v712, 1
  %v714 = vadd.f32 %v712, %v713
  %v715 = vld [vmem:[%s8] sm:$0xff]
  %v716 = vld [vmem:[%s8 + $0x8] sm:$0xff]
  %v717 = vld [vmem:[%s8 + $0x10] sm:$0xff]
  %v718 = vld [vmem:[%s8 + $0x18] sm:$0xff]
  %v719 = vld [vmem:[%s8 + $0x20] sm:$0xff]
  %v720 = vld [vmem:[%s8 + $0x28] sm:$0xff]
  %v721 = vld [vmem:[%s8 + $0x30] sm:$0xff]
  %v722 = vld [vmem:[%s8 + $0x38] sm:$0xff]
  %v723 = vld [vmem:[%s8 + $0x40] sm:$0xff]
  %v724 = vld [vmem:[%s8 + $0x48] sm:$0xff]
  %v725 = vld [vmem:[%s8 + $0x50] sm:$0xff]
  %v726 = vld [vmem:[%s8 + $0x58] sm:$0xff]
  %v727 = vld [vmem:[%s8 + $0x60] sm:$0xff]
  %v728 = vld [vmem:[%s8 + $0x68] sm:$0xff]
  %v729 = vld [vmem:[%s8 + $0x70] sm:$0xff]
  %v730 = vld [vmem:[%s8 + $0x78] sm:$0xff]
  %731 = vmatprep.subr.mxu0 0.0
  %732 = vmatpush1.msra.mxu0 %v715
  %733 = vmatprep.subr.mxu0 0.0
  %734 = vmatpush1.msra.mxu0 %v716
  %735 = vmatprep.subr.mxu0 0.0
  %736 = vmatpush1.msra.mxu0 %v717
  %737 = vmatprep.subr.mxu0 0.0
  %738 = vmatpush1.msra.mxu0 %v718
  %739 = vmatprep.subr.mxu0 0.0
  %740 = vmatpush1.msra.mxu0 %v719
  %741 = vmatprep.subr.mxu0 0.0
  %742 = vmatpush1.msra.mxu0 %v720
  %743 = vmatprep.subr.mxu0 0.0
  %744 = vmatpush1.msra.mxu0 %v721
  %745 = vmatprep.subr.mxu0 0.0
  %746 = vmatpush1.msra.mxu0 %v722
  %747 = vmatprep.subr.mxu0 0.0
  %748 = vmatpush1.msra.mxu0 %v723
  %749 = vmatprep.subr.mxu0 0.0
  %750 = vmatpush1.msra.mxu0 %v724
  %751 = vmatprep.subr.mxu0 0.0
  %752 = vmatpush1.msra.mxu0 %v725
  %753 = vmatprep.subr.mxu0 0.0
  %754 = vmatpush1.msra.mxu0 %v726
  %755 = vmatprep.subr.mxu0 0.0
  %756 = vmatpush1.msra.mxu0 %v727
  %757 = vmatprep.subr.mxu0 0.0
  %758 = vmatpush1.msra.mxu0 %v728
  %759 = vmatprep.subr.mxu0 0.0
  %760 = vmatpush1.msra.mxu0 %v729
  %761 = vmatprep.subr.mxu0 0.0
  %762 = vmatpush1.msra.mxu0 %v730
  %763 = vmatprep.subr.mxu0 0.0
  %764 = vmatpush1.msra.mxu0 0.0
  %765 = vmatprep.subr.mxu0 0.0
  %766 = vmatpush1.msra.mxu0 0.0
  %767 = vmatprep.subr.mxu0 0.0
  %768 = vmatpush1.msra.mxu0 0.0
  %769 = vmatprep.subr.mxu0 0.0
  %770 = vmatpush1.msra.mxu0 0.0
  %771 = vmatprep.subr.mxu0 0.0
  %772 = vmatpush1.msra.mxu0 0.0
  %773 = vmatprep.subr.mxu0 0.0
  %774 = vmatpush1.msra.mxu0 0.0
  %775 = vmatprep.subr.mxu0 0.0
  %776 = vmatpush1.msra.mxu0 0.0
  %777 = vmatprep.subr.mxu0 0.0
  %778 = vmatpush1.msra.mxu0 0.0
  %779 = vmatprep.subr.mxu0 0.0
  %780 = vmatpush1.msra.mxu0 0.0
  %781 = vmatprep.subr.mxu0 0.0
  %782 = vmatpush1.msra.mxu0 0.0
  %783 = vmatprep.subr.mxu0 0.0
  %784 = vmatpush1.msra.mxu0 0.0
  %785 = vmatprep.subr.mxu0 0.0
  %786 = vmatpush1.msra.mxu0 0.0
  %787 = vmatprep.subr.mxu0 0.0
  %788 = vmatpush1.msra.mxu0 0.0
  %789 = vmatprep.subr.mxu0 0.0
  %790 = vmatpush1.msra.mxu0 0.0
  %791 = vmatprep.subr.mxu0 0.0
  %792 = vmatpush1.msra.mxu0 0.0
  %793 = vmatprep.subr.mxu0 0.0
  %794 = vmatpush1.msra.mxu0 0.0
  %795 = vmatprep.mubr.f32.mxu0 0.0
  %796 = vmatmul.mubr.f32.gmra.mrb[0].mxu0 %v714
  %v797 = vpop.f32.mrb[0].mxu0
  %v798 = vadd.f32 0.0, %v797
  %v799 = vpop.f32.mrb[0].mxu0
  %800 = vdwg.mxu0
  %v801 = vmul.f32 %v798, 0.03125
  %v802 = vlaneseq
  %v803 = vshrl.u32 %v802, 7
  %v804 = vsub.s32 0, %v803
  %v805 = vrot.slane %v801, %v804
  %v806 = vsub.f32 %v702, %v805
  %v807 = vsub.f32 %v703, %v805
  %v808 = vsub.f32 %v704, %v805
  %v809 = vsub.f32 %v705, %v805
  %v810 = vmul.f32 %v806, %v806
  %v811 = vmul.f32 %v807, %v807
  %v812 = vmul.f32 %v808, %v808
  %v813 = vmul.f32 %v809, %v809
  %v814 = vadd.f32 %v810, %v811
  %v815 = vadd.f32 %v814, %v812
  %v816 = vadd.f32 %v815, %v813
  %v817 = vrot.slane %v816, 4
  %v818 = vadd.f32 %v816, %v817
  %v819 = vrot.slane %v818, 2
  %v820 = vadd.f32 %v818, %v819
  %v821 = vrot.slane %v820, 1
  %v822 = vadd.f32 %v820, %v821
  %823 = vmatprep.subr.mxu0 0.0
  %824 = vmatpush1.msra.mxu0 %v715
  %825 = vmatprep.subr.mxu0 0.0
  %826 = vmatpush1.msra.mxu0 %v716
  %827 = vmatprep.subr.mxu0 0.0
  %828 = vmatpush1.msra.mxu0 %v717
  %829 = vmatprep.subr.mxu0 0.0
  %830 = vmatpush1.msra.mxu0 %v718
  %831 = vmatprep.subr.mxu0 0.0
  %832 = vmatpush1.msra.mxu0 %v719
  %833 = vmatprep.subr.mxu0 0.0
  %834 = vmatpush1.msra.mxu0 %v720
  %835 = vmatprep.subr.mxu0 0.0
  %836 = vmatpush1.msra.mxu0 %v721
  %837 = vmatprep.subr.mxu0 0.0
  %838 = vmatpush1.msra.mxu0 %v722
  %839 = vmatprep.subr.mxu0 0.0
  %840 = vmatpush1.msra.mxu0 %v723
  %841 = vmatprep.subr.mxu0 0.0
  %842 = vmatpush1.msra.mxu0 %v724
  %843 = vmatprep.subr.mxu0 0.0
  %844 = vmatpush1.msra.mxu0 %v725
  %845 = vmatprep.subr.mxu0 0.0
  %846 = vmatpush1.msra.mxu0 %v726
  %847 = vmatprep.subr.mxu0 0.0
  %848 = vmatpush1.msra.mxu0 %v727
  %849 = vmatprep.subr.mxu0 0.0
  %850 = vmatpush1.msra.mxu0 %v728
  %851 = vmatprep.subr.mxu0 0.0
  %852 = vmatpush1.msra.mxu0 %v729
  %853 = vmatprep.subr.mxu0 0.0
  %854 = vmatpush1.msra.mxu0 %v730
  %855 = vmatprep.subr.mxu0 0.0
  %856 = vmatpush1.msra.mxu0 0.0
  %857 = vmatprep.subr.mxu0 0.0
  %858 = vmatpush1.msra.mxu0 0.0
  %859 = vmatprep.subr.mxu0 0.0
  %860 = vmatpush1.msra.mxu0 0.0
  %861 = vmatprep.subr.mxu0 0.0
  %862 = vmatpush1.msra.mxu0 0.0
  %863 = vmatprep.subr.mxu0 0.0
  %864 = vmatpush1.msra.mxu0 0.0
  %865 = vmatprep.subr.mxu0 0.0
  %866 = vmatpush1.msra.mxu0 0.0
  %867 = vmatprep.subr.mxu0 0.0
  %868 = vmatpush1.msra.mxu0 0.0
  %869 = vmatprep.subr.mxu0 0.0
  %870 = vmatpush1.msra.mxu0 0.0
  %871 = vmatprep.subr.mxu0 0.0
  %872 = vmatpush1.msra.mxu0 0.0
  %873 = vmatprep.subr.mxu0 0.0
  %874 = vmatpush1.msra.mxu0 0.0
  %875 = vmatprep.subr.mxu0 0.0
  %876 = vmatpush1.msra.mxu0 0.0
  %877 = vmatprep.subr.mxu0 0.0
  %878 = vmatpush1.msra.mxu0 0.0
  %879 = vmatprep.subr.mxu0 0.0
  %880 = vmatpush1.msra.mxu0 0.0
  %881 = vmatprep.subr.mxu0 0.0
  %882 = vmatpush1.msra.mxu0 0.0
  %883 = vmatprep.subr.mxu0 0.0
  %884 = vmatpush1.msra.mxu0 0.0
  %885 = vmatprep.subr.mxu0 0.0
  %886 = vmatpush1.msra.mxu0 0.0
  %887 = vmatprep.mubr.f32.mxu0 0.0
  %888 = vmatmul.mubr.f32.gmra.mrb[0].mxu0 %v822
  %v889 = vpop.f32.mrb[0].mxu0
  %v890 = vadd.f32 0.0, %v889
  %v891 = vpop.f32.mrb[0].mxu0
  %892 = vdwg.mxu0
  %v893 = vmul.f32 %v890, 0.03125
  %v894 = vld [vmem:[%s9] sm:$0x1]
  %v895 = vadd.f32 %v893, 1e-05
  %v896 = vrsqrt.pop %v895
  %v897 = vmul.f32 %v894, %v896
  %v899 = vlaneseq
  %v900 = vshrl.u32 %v899, 7
  %v901 = vsub.s32 0, %v900
  %v902 = vrot.slane %v897, %v901
  %v904 = vmul.f32 %v806, %v902
  %v905 = vmul.f32 %v807, %v902
  %v906 = vmul.f32 %v808, %v902
  %v907 = vmul.f32 %v809, %v902
  %v908 = vld [vmem:[%s10] sm:$0x1]
  %v910 = vlaneseq
  %v911 = vshrl.u32 %v910, 7
  %v912 = vsub.s32 0, %v911
  %v913 = vrot.slane %v908, %v912
  %v915 = vadd.f32 %v904, %v913
  %v916 = vadd.f32 %v905, %v913
  %v917 = vadd.f32 %v906, %v913
  %v918 = vadd.f32 %v907, %v913
  %v919 = vmax.f32 %v915, 0.0
  %v920 = vmax.f32 %v916, 0.0
  %v921 = vmax.f32 %v917, 0.0
  %v922 = vmax.f32 %v918, 0.0
  %v923 = vpack.c.bf16 %v920, %v919
  %v924 = vpack.c.bf16 %v922, %v921
  %v925 = vld [vmem:[%s11] sm:$0xf]
  %v926 = vld [vmem:[%s11 + $0x4] sm:$0xf]
  %v927 = vld [vmem:[%s11 + $0x8] sm:$0xf]
  %v928 = vld [vmem:[%s11 + $0xc] sm:$0xf]
  %v929 = vld [vmem:[%s11 + $0x10] sm:$0xf]
  %v930 = vld [vmem:[%s11 + $0x14] sm:$0xf]
  %v931 = vld [vmem:[%s11 + $0x18] sm:$0xf]
  %v932 = vld [vmem:[%s11 + $0x1c] sm:$0xf]
  %v933 = vld [vmem:[%s11 + $0x20] sm:$0xf]
  %v934 = vld [vmem:[%s11 + $0x24] sm:$0xf]
  %v935 = vld [vmem:[%s11 + $0x28] sm:$0xf]
  %v936 = vld [vmem:[%s11 + $0x2c] sm:$0xf]
  %v937 = vld [vmem:[%s11 + $0x30] sm:$0xf]
  %v938 = vld [vmem:[%s11 + $0x34] sm:$0xf]
  %v939 = vld [vmem:[%s11 + $0x38] sm:$0xf]
  %v940 = vld [vmem:[%s11 + $0x3c] sm:$0xf]
  %v957 = vunpack.c.l.b16 %v925
  %v958 = vunpack.c.l.b16 %v926
  %v959 = vunpack.c.l.b16 %v927
  %v960 = vunpack.c.l.b16 %v928
  %v961 = vunpack.c.l.b16 %v929
  %v962 = vunpack.c.l.b16 %v930
  %v963 = vunpack.c.l.b16 %v931
  %v964 = vunpack.c.l.b16 %v932
  %v965 = vunpack.c.l.b16 %v933
  %v966 = vunpack.c.l.b16 %v934
  %v967 = vunpack.c.l.b16 %v935
  %v968 = vunpack.c.l.b16 %v936
  %v969 = vunpack.c.l.b16 %v937
  %v970 = vunpack.c.l.b16 %v938
  %v971 = vunpack.c.l.b16 %v939
  %v972 = vunpack.c.l.b16 %v940
  %v973 = vpack.c.b16 %v958, %v957
  %v974 = vpack.c.b16 %v960, %v959
  %v975 = vpack.c.b16 %v962, %v961
  %v976 = vpack.c.b16 %v964, %v963
  %v977 = vpack.c.b16 %v966, %v965
  %v978 = vpack.c.b16 %v968, %v967
  %v979 = vpack.c.b16 %v970, %v969
  %v980 = vpack.c.b16 %v972, %v971
  %989 = vmatprep.subr.bf16.mxu0 0
  %990 = vmatpush1.bf16.msra.mxu0 %v973
  %991 = vmatprep.subr.bf16.mxu0 0
  %992 = vmatpush1.bf16.msra.mxu0 %v974
  %993 = vmatprep.subr.bf16.mxu0 0
  %994 = vmatpush1.bf16.msra.mxu0 %v975
  %995 = vmatprep.subr.bf16.mxu0 0
  %996 = vmatpush1.bf16.msra.mxu0 %v976
  %997 = vmatprep.subr.bf16.mxu0 0
  %998 = vmatpush1.bf16.msra.mxu0 %v977
  %999 = vmatprep.subr.bf16.mxu0 0
  %1000 = vmatpush1.bf16.msra.mxu0 %v978
  %1001 = vmatprep.subr.bf16.mxu0 0
  %1002 = vmatpush1.bf16.msra.mxu0 %v979
  %1003 = vmatprep.subr.bf16.mxu0 0
  %1004 = vmatpush1.bf16.msra.mxu0 %v980
  %1005 = vmatprep.subr.bf16.mxu0 0
  %1006 = vmatpush1.bf16.msra.mxu0 0
  %1007 = vmatprep.subr.bf16.mxu0 0
  %1008 = vmatpush1.bf16.msra.mxu0 0
  %1009 = vmatprep.subr.bf16.mxu0 0
  %1010 = vmatpush1.bf16.msra.mxu0 0
  %1011 = vmatprep.subr.bf16.mxu0 0
  %1012 = vmatpush1.bf16.msra.mxu0 0
  %1013 = vmatprep.subr.bf16.mxu0 0
  %1014 = vmatpush1.bf16.msra.mxu0 0
  %1015 = vmatprep.subr.bf16.mxu0 0
  %1016 = vmatpush1.bf16.msra.mxu0 0
  %1017 = vmatprep.subr.bf16.mxu0 0
  %1018 = vmatpush1.bf16.msra.mxu0 0
  %1019 = vmatprep.subr.bf16.mxu0 0
  %1020 = vmatpush1.bf16.msra.mxu0 0
  %1021 = vmatprep.mubr.bf16.mxu0 0
  %1022 = vmatmul.mubr.bf16.gmra.mrb[0].mxu0 %v923
  %v1023 = vpop.f32.mrb[0].mxu0
  %v1024 = vadd.f32 0.0, %v1023
  %v1025 = vpop.f32.mrb[0].mxu0
  %v1026 = vpop.f32.mrb[0].mxu0
  %v1027 = vadd.f32 0.0, %v1026
  %v1028 = vpop.f32.mrb[0].mxu0
  %1029 = vmatprep.mubr.bf16.mxu0 0
  %1030 = vmatmul.mubr.bf16.gmra.mrb[0].mxu0 %v924
  %v1031 = vpop.f32.mrb[0].mxu0
  %v1032 = vadd.f32 0.0, %v1031
  %v1033 = vpop.f32.mrb[0].mxu0
  %v1034 = vpop.f32.mrb[0].mxu0
  %v1035 = vadd.f32 0.0, %v1034
  %v1036 = vpop.f32.mrb[0].mxu0
  %1037 = vdwg.mxu0
  %s1038 = scalar_lea.vmem %s11, 64
  %v1039 = vld [vmem:[%s1038] sm:$0xf]
  %v1040 = vld [vmem:[%s1038 + $0x4] sm:$0xf]
  %v1041 = vld [vmem:[%s1038 + $0x8] sm:$0xf]
  %v1042 = vld [vmem:[%s1038 + $0xc] sm:$0xf]
  %v1043 = vld [vmem:[%s1038 + $0x10] sm:$0xf]
  %v1044 = vld [vmem:[%s1038 + $0x14] sm:$0xf]
  %v1045 = vld [vmem:[%s1038 + $0x18] sm:$0xf]
  %v1046 = vld [vmem:[%s1038 + $0x1c] sm:$0xf]
  %v1047 = vld [vmem:[%s1038 + $0x20] sm:$0xf]
  %v1048 = vld [vmem:[%s1038 + $0x24] sm:$0xf]
  %v1049 = vld [vmem:[%s1038 + $0x28] sm:$0xf]
  %v1050 = vld [vmem:[%s1038 + $0x2c] sm:$0xf]
  %v1051 = vld [vmem:[%s1038 + $0x30] sm:$0xf]
  %v1052 = vld [vmem:[%s1038 + $0x34] sm:$0xf]
  %v1053 = vld [vmem:[%s1038 + $0x38] sm:$0xf]
  %v1054 = vld [vmem:[%s1038 + $0x3c] sm:$0xf]
  %s1055 = scalar_lea.vmem %s11, 128
  %v1056 = vld [vmem:[%s1055] sm:$0xf]
  %v1057 = vld [vmem:[%s1055 + $0x4] sm:$0xf]
  %v1058 = vld [vmem:[%s1055 + $0x8] sm:$0xf]
  %v1059 = vld [vmem:[%s1055 + $0xc] sm:$0xf]
  %v1060 = vld [vmem:[%s1055 + $0x10] sm:$0xf]
  %v1061 = vld [vmem:[%s1055 + $0x14] sm:$0xf]
  %v1062 = vld [vmem:[%s1055 + $0x18] sm:$0xf]
  %v1063 = vld [vmem:[%s1055 + $0x1c] sm:$0xf]
  %v1064 = vld [vmem:[%s1055 + $0x20] sm:$0xf]
  %v1065 = vld [vmem:[%s1055 + $0x24] sm:$0xf]
  %v1066 = vld [vmem:[%s1055 + $0x28] sm:$0xf]
  %v1067 = vld [vmem:[%s1055 + $0x2c] sm:$0xf]
  %v1068 = vld [vmem:[%s1055 + $0x30] sm:$0xf]
  %v1069 = vld [vmem:[%s1055 + $0x34] sm:$0xf]
  %v1070 = vld [vmem:[%s1055 + $0x38] sm:$0xf]
  %v1071 = vld [vmem:[%s1055 + $0x3c] sm:$0xf]
  %v1088 = vunpack.c.l.b16 %v1056
  %v1089 = vunpack.c.l.b16 %v1057
  %v1090 = vunpack.c.l.b16 %v1058
  %v1091 = vunpack.c.l.b16 %v1059
  %v1092 = vunpack.c.l.b16 %v1060
  %v1093 = vunpack.c.l.b16 %v1061
  %v1094 = vunpack.c.l.b16 %v1062
  %v1095 = vunpack.c.l.b16 %v1063
  %v1096 = vunpack.c.l.b16 %v1064
  %v1097 = vunpack.c.l.b16 %v1065
  %v1098 = vunpack.c.l.b16 %v1066
  %v1099 = vunpack.c.l.b16 %v1067
  %v1100 = vunpack.c.l.b16 %v1068
  %v1101 = vunpack.c.l.b16 %v1069
  %v1102 = vunpack.c.l.b16 %v1070
  %v1103 = vunpack.c.l.b16 %v1071
  %v1104 = vpack.c.b16 %v1089, %v1088
  %v1105 = vpack.c.b16 %v1091, %v1090
  %v1106 = vpack.c.b16 %v1093, %v1092
  %v1107 = vpack.c.b16 %v1095, %v1094
  %v1108 = vpack.c.b16 %v1097, %v1096
  %v1109 = vpack.c.b16 %v1099, %v1098
  %v1110 = vpack.c.b16 %v1101, %v1100
  %v1111 = vpack.c.b16 %v1103, %v1102
  %1120 = vmatprep.subr.bf16.mxu0 0
  %1121 = vmatpush1.bf16.msra.mxu0 %v1104
  %1122 = vmatprep.subr.bf16.mxu0 0
  %1123 = vmatpush1.bf16.msra.mxu0 %v1105
  %1124 = vmatprep.subr.bf16.mxu0 0
  %1125 = vmatpush1.bf16.msra.mxu0 %v1106
  %1126 = vmatprep.subr.bf16.mxu0 0
  %1127 = vmatpush1.bf16.msra.mxu0 %v1107
  %1128 = vmatprep.subr.bf16.mxu0 0
  %1129 = vmatpush1.bf16.msra.mxu0 %v1108
  %1130 = vmatprep.subr.bf16.mxu0 0
  %1131 = vmatpush1.bf16.msra.mxu0 %v1109
  %1132 = vmatprep.subr.bf16.mxu0 0
  %1133 = vmatpush1.bf16.msra.mxu0 %v1110
  %1134 = vmatprep.subr.bf16.mxu0 0
  %1135 = vmatpush1.bf16.msra.mxu0 %v1111
  %1136 = vmatprep.subr.bf16.mxu0 0
  %1137 = vmatpush1.bf16.msra.mxu0 0
  %1138 = vmatprep.subr.bf16.mxu0 0
  %1139 = vmatpush1.bf16.msra.mxu0 0
  %1140 = vmatprep.subr.bf16.mxu0 0
  %1141 = vmatpush1.bf16.msra.mxu0 0
  %1142 = vmatprep.subr.bf16.mxu0 0
  %1143 = vmatpush1.bf16.msra.mxu0 0
  %1144 = vmatprep.subr.bf16.mxu0 0
  %1145 = vmatpush1.bf16.msra.mxu0 0
  %1146 = vmatprep.subr.bf16.mxu0 0
  %1147 = vmatpush1.bf16.msra.mxu0 0
  %1148 = vmatprep.subr.bf16.mxu0 0
  %1149 = vmatpush1.bf16.msra.mxu0 0
  %1150 = vmatprep.subr.bf16.mxu0 0
  %1151 = vmatpush1.bf16.msra.mxu0 0
  %1152 = vmatprep.mubr.bf16.mxu0 0
  %1153 = vmatmul.mubr.bf16.gmra.mrb[0].mxu0 %v923
  %v1154 = vpop.f32.mrb[0].mxu0
  %v1155 = vadd.f32 0.0, %v1154
  %v1156 = vpop.f32.mrb[0].mxu0
  %v1157 = vpop.f32.mrb[0].mxu0
  %v1158 = vadd.f32 0.0, %v1157
  %v1159 = vpop.f32.mrb[0].mxu0
  %1160 = vmatprep.mubr.bf16.mxu0 0
  %1161 = vmatmul.mubr.bf16.gmra.mrb[0].mxu0 %v924
  %v1162 = vpop.f32.mrb[0].mxu0
  %v1163 = vadd.f32 0.0, %v1162
  %v1164 = vpop.f32.mrb[0].mxu0
  %v1165 = vpop.f32.mrb[0].mxu0
  %v1166 = vadd.f32 0.0, %v1165
  %v1167 = vpop.f32.mrb[0].mxu0
  %1168 = vdwg.mxu0
  %v1169 = vrot.slane %v1024, 7
  %v1170 = vrot.slane %v1027, 7
  %v1171 = vrot.slane %v1032, 7
  %v1172 = vrot.slane %v1035, 7
  %v1173 = vsel %vm532, %v1171, %v1172
  %v1174 = vsel %vm532, %v1170, %v1171
  %v1175 = vsel %vm532, %v1169, %v1170
  %v1176 = vsel %vm532, %v1172, %v1169
  %v1177 = vmul.f32 %v1176, %v540
  %v1178 = vmul.f32 %v1175, %v545
  %v1179 = vmul.f32 %v1174, %v550
  %v1180 = vmul.f32 %v1173, %v555
  %v1197 = vunpack.c.l.b16 %v1039
  %v1198 = vunpack.c.l.b16 %v1040
  %v1199 = vunpack.c.l.b16 %v1041
  %v1200 = vunpack.c.l.b16 %v1042
  %v1201 = vunpack.c.l.b16 %v1043
  %v1202 = vunpack.c.l.b16 %v1044
  %v1203 = vunpack.c.l.b16 %v1045
  %v1204 = vunpack.c.l.b16 %v1046
  %v1205 = vunpack.c.l.b16 %v1047
  %v1206 = vunpack.c.l.b16 %v1048
  %v1207 = vunpack.c.l.b16 %v1049
  %v1208 = vunpack.c.l.b16 %v1050
  %v1209 = vunpack.c.l.b16 %v1051
  %v1210 = vunpack.c.l.b16 %v1052
  %v1211 = vunpack.c.l.b16 %v1053
  %v1212 = vunpack.c.l.b16 %v1054
  %v1213 = vpack.c.b16 %v1198, %v1197
  %v1214 = vpack.c.b16 %v1200, %v1199
  %v1215 = vpack.c.b16 %v1202, %v1201
  %v1216 = vpack.c.b16 %v1204, %v1203
  %v1217 = vpack.c.b16 %v1206, %v1205
  %v1218 = vpack.c.b16 %v1208, %v1207
  %v1219 = vpack.c.b16 %v1210, %v1209
  %v1220 = vpack.c.b16 %v1212, %v1211
  %1229 = vmatprep.subr.bf16.mxu0 0
  %1230 = vmatpush1.bf16.msra.mxu0 %v1213
  %1231 = vmatprep.subr.bf16.mxu0 0
  %1232 = vmatpush1.bf16.msra.mxu0 %v1214
  %1233 = vmatprep.subr.bf16.mxu0 0
  %1234 = vmatpush1.bf16.msra.mxu0 %v1215
  %1235 = vmatprep.subr.bf16.mxu0 0
  %1236 = vmatpush1.bf16.msra.mxu0 %v1216
  %1237 = vmatprep.subr.bf16.mxu0 0
  %1238 = vmatpush1.bf16.msra.mxu0 %v1217
  %1239 = vmatprep.subr.bf16.mxu0 0
  %1240 = vmatpush1.bf16.msra.mxu0 %v1218
  %1241 = vmatprep.subr.bf16.mxu0 0
  %1242 = vmatpush1.bf16.msra.mxu0 %v1219
  %1243 = vmatprep.subr.bf16.mxu0 0
  %1244 = vmatpush1.bf16.msra.mxu0 %v1220
  %1245 = vmatprep.subr.bf16.mxu0 0
  %1246 = vmatpush1.bf16.msra.mxu0 0
  %1247 = vmatprep.subr.bf16.mxu0 0
  %1248 = vmatpush1.bf16.msra.mxu0 0
  %1249 = vmatprep.subr.bf16.mxu0 0
  %1250 = vmatpush1.bf16.msra.mxu0 0
  %1251 = vmatprep.subr.bf16.mxu0 0
  %1252 = vmatpush1.bf16.msra.mxu0 0
  %1253 = vmatprep.subr.bf16.mxu0 0
  %1254 = vmatpush1.bf16.msra.mxu0 0
  %1255 = vmatprep.subr.bf16.mxu0 0
  %1256 = vmatpush1.bf16.msra.mxu0 0
  %1257 = vmatprep.subr.bf16.mxu0 0
  %1258 = vmatpush1.bf16.msra.mxu0 0
  %1259 = vmatprep.subr.bf16.mxu0 0
  %1260 = vmatpush1.bf16.msra.mxu0 0
  %1261 = vmatprep.mubr.bf16.mxu0 0
  %1262 = vmatmul.mubr.bf16.gmra.mrb[0].mxu0 %v923
  %v1263 = vpop.f32.mrb[0].mxu0
  %v1264 = vadd.f32 %v1177, %v1263
  %v1265 = vpop.f32.mrb[0].mxu0
  %v1266 = vpop.f32.mrb[0].mxu0
  %v1267 = vadd.f32 %v1178, %v1266
  %v1268 = vpop.f32.mrb[0].mxu0
  %1269 = vmatprep.mubr.bf16.mxu0 0
  %1270 = vmatmul.mubr.bf16.gmra.mrb[0].mxu0 %v924
  %v1271 = vpop.f32.mrb[0].mxu0
  %v1272 = vadd.f32 %v1179, %v1271
  %v1273 = vpop.f32.mrb[0].mxu0
  %v1274 = vpop.f32.mrb[0].mxu0
  %v1275 = vadd.f32 %v1180, %v1274
  %v1276 = vpop.f32.mrb[0].mxu0
  %1277 = vdwg.mxu0
  %v1278 = vrot.slane %v1155, 1
  %v1279 = vrot.slane %v1158, 1
  %v1280 = vrot.slane %v1163, 1
  %v1281 = vrot.slane %v1166, 1
  %v1282 = vsel %vm662, %v1280, %v1281
  %v1283 = vsel %vm662, %v1279, %v1280
  %v1284 = vsel %vm662, %v1278, %v1279
  %v1285 = vsel %vm662, %v1281, %v1278
  %v1286 = vmul.f32 %v1284, %v670
  %v1287 = vmul.f32 %v1283, %v675
  %v1288 = vmul.f32 %v1282, %v680
  %v1289 = vmul.f32 %v1285, %v685
  %v1290 = vadd.f32 %v1264, %v1286
  %v1291 = vadd.f32 %v1267, %v1287
  %v1292 = vadd.f32 %v1272, %v1288
  %v1293 = vadd.f32 %v1275, %v1289
  %v1294 = vld [vmem:[%s12] sm:$0x1]
  %v1296 = vlaneseq
  %v1297 = vshrl.u32 %v1296, 7
  %v1298 = vsub.s32 0, %v1297
  %v1299 = vrot.slane %v1294, %v1298
  %v1301 = vadd.f32 %v1290, %v1299
  %v1302 = vadd.f32 %v1291, %v1299
  %v1303 = vadd.f32 %v1292, %v1299
  %v1304 = vadd.f32 %v1293, %v1299
  %v1305 = vpack.c.bf16 %v52, %v51
  %v1306 = vpack.c.bf16 %v54, %v53
  %v1307 = vld [vmem:[%s13] sm:$0xf]
  %v1308 = vld [vmem:[%s13 + $0x4] sm:$0xf]
  %v1309 = vld [vmem:[%s13 + $0x8] sm:$0xf]
  %v1310 = vld [vmem:[%s13 + $0xc] sm:$0xf]
  %v1311 = vld [vmem:[%s13 + $0x10] sm:$0xf]
  %v1312 = vld [vmem:[%s13 + $0x14] sm:$0xf]
  %v1313 = vld [vmem:[%s13 + $0x18] sm:$0xf]
  %v1314 = vld [vmem:[%s13 + $0x1c] sm:$0xf]
  %v1315 = vld [vmem:[%s13 + $0x20] sm:$0xf]
  %v1316 = vld [vmem:[%s13 + $0x24] sm:$0xf]
  %v1317 = vld [vmem:[%s13 + $0x28] sm:$0xf]
  %v1318 = vld [vmem:[%s13 + $0x2c] sm:$0xf]
  %v1319 = vld [vmem:[%s13 + $0x30] sm:$0xf]
  %v1320 = vld [vmem:[%s13 + $0x34] sm:$0xf]
  %v1321 = vld [vmem:[%s13 + $0x38] sm:$0xf]
  %v1322 = vld [vmem:[%s13 + $0x3c] sm:$0xf]
  %v1339 = vunpack.c.l.b16 %v1307
  %v1340 = vunpack.c.l.b16 %v1308
  %v1341 = vunpack.c.l.b16 %v1309
  %v1342 = vunpack.c.l.b16 %v1310
  %v1343 = vunpack.c.l.b16 %v1311
  %v1344 = vunpack.c.l.b16 %v1312
  %v1345 = vunpack.c.l.b16 %v1313
  %v1346 = vunpack.c.l.b16 %v1314
  %v1347 = vunpack.c.l.b16 %v1315
  %v1348 = vunpack.c.l.b16 %v1316
  %v1349 = vunpack.c.l.b16 %v1317
  %v1350 = vunpack.c.l.b16 %v1318
  %v1351 = vunpack.c.l.b16 %v1319
  %v1352 = vunpack.c.l.b16 %v1320
  %v1353 = vunpack.c.l.b16 %v1321
  %v1354 = vunpack.c.l.b16 %v1322
  %v1355 = vpack.c.b16 %v1340, %v1339
  %v1356 = vpack.c.b16 %v1342, %v1341
  %v1357 = vpack.c.b16 %v1344, %v1343
  %v1358 = vpack.c.b16 %v1346, %v1345
  %v1359 = vpack.c.b16 %v1348, %v1347
  %v1360 = vpack.c.b16 %v1350, %v1349
  %v1361 = vpack.c.b16 %v1352, %v1351
  %v1362 = vpack.c.b16 %v1354, %v1353
  %1371 = vmatprep.subr.bf16.mxu0 0
  %1372 = vmatpush1.bf16.msra.mxu0 %v1355
  %1373 = vmatprep.subr.bf16.mxu0 0
  %1374 = vmatpush1.bf16.msra.mxu0 %v1356
  %1375 = vmatprep.subr.bf16.mxu0 0
  %1376 = vmatpush1.bf16.msra.mxu0 %v1357
  %1377 = vmatprep.subr.bf16.mxu0 0
  %1378 = vmatpush1.bf16.msra.mxu0 %v1358
  %1379 = vmatprep.subr.bf16.mxu0 0
  %1380 = vmatpush1.bf16.msra.mxu0 %v1359
  %1381 = vmatprep.subr.bf16.mxu0 0
  %1382 = vmatpush1.bf16.msra.mxu0 %v1360
  %1383 = vmatprep.subr.bf16.mxu0 0
  %1384 = vmatpush1.bf16.msra.mxu0 %v1361
  %1385 = vmatprep.subr.bf16.mxu0 0
  %1386 = vmatpush1.bf16.msra.mxu0 %v1362
  %1387 = vmatprep.subr.bf16.mxu0 0
  %1388 = vmatpush1.bf16.msra.mxu0 0
  %1389 = vmatprep.subr.bf16.mxu0 0
  %1390 = vmatpush1.bf16.msra.mxu0 0
  %1391 = vmatprep.subr.bf16.mxu0 0
  %1392 = vmatpush1.bf16.msra.mxu0 0
  %1393 = vmatprep.subr.bf16.mxu0 0
  %1394 = vmatpush1.bf16.msra.mxu0 0
  %1395 = vmatprep.subr.bf16.mxu0 0
  %1396 = vmatpush1.bf16.msra.mxu0 0
  %1397 = vmatprep.subr.bf16.mxu0 0
  %1398 = vmatpush1.bf16.msra.mxu0 0
  %1399 = vmatprep.subr.bf16.mxu0 0
  %1400 = vmatpush1.bf16.msra.mxu0 0
  %1401 = vmatprep.subr.bf16.mxu0 0
  %1402 = vmatpush1.bf16.msra.mxu0 0
  %1403 = vmatprep.mubr.bf16.mxu0 0
  %1404 = vmatmul.mubr.bf16.gmra.mrb[0].mxu0 %v1305
  %v1405 = vpop.f32.mrb[0].mxu0
  %v1406 = vadd.f32 0.0, %v1405
  %v1407 = vpop.f32.mrb[0].mxu0
  %v1408 = vpop.f32.mrb[0].mxu0
  %v1409 = vadd.f32 0.0, %v1408
  %v1410 = vpop.f32.mrb[0].mxu0
  %1411 = vmatprep.mubr.bf16.mxu0 0
  %1412 = vmatmul.mubr.bf16.gmra.mrb[0].mxu0 %v1306
  %v1413 = vpop.f32.mrb[0].mxu0
  %v1414 = vadd.f32 0.0, %v1413
  %v1415 = vpop.f32.mrb[0].mxu0
  %v1416 = vpop.f32.mrb[0].mxu0
  %v1417 = vadd.f32 0.0, %v1416
  %v1418 = vpop.f32.mrb[0].mxu0
  %1419 = vdwg.mxu0
  %s1420 = scalar_lea.vmem %s13, 64
  %v1421 = vld [vmem:[%s1420] sm:$0xf]
  %v1422 = vld [vmem:[%s1420 + $0x4] sm:$0xf]
  %v1423 = vld [vmem:[%s1420 + $0x8] sm:$0xf]
  %v1424 = vld [vmem:[%s1420 + $0xc] sm:$0xf]
  %v1425 = vld [vmem:[%s1420 + $0x10] sm:$0xf]
  %v1426 = vld [vmem:[%s1420 + $0x14] sm:$0xf]
  %v1427 = vld [vmem:[%s1420 + $0x18] sm:$0xf]
  %v1428 = vld [vmem:[%s1420 + $0x1c] sm:$0xf]
  %v1429 = vld [vmem:[%s1420 + $0x20] sm:$0xf]
  %v1430 = vld [vmem:[%s1420 + $0x24] sm:$0xf]
  %v1431 = vld [vmem:[%s1420 + $0x28] sm:$0xf]
  %v1432 = vld [vmem:[%s1420 + $0x2c] sm:$0xf]
  %v1433 = vld [vmem:[%s1420 + $0x30] sm:$0xf]
  %v1434 = vld [vmem:[%s1420 + $0x34] sm:$0xf]
  %v1435 = vld [vmem:[%s1420 + $0x38] sm:$0xf]
  %v1436 = vld [vmem:[%s1420 + $0x3c] sm:$0xf]
  %s1437 = scalar_lea.vmem %s13, 128
  %v1438 = vld [vmem:[%s1437] sm:$0xf]
  %v1439 = vld [vmem:[%s1437 + $0x4] sm:$0xf]
  %v1440 = vld [vmem:[%s1437 + $0x8] sm:$0xf]
  %v1441 = vld [vmem:[%s1437 + $0xc] sm:$0xf]
  %v1442 = vld [vmem:[%s1437 + $0x10] sm:$0xf]
  %v1443 = vld [vmem:[%s1437 + $0x14] sm:$0xf]
  %v1444 = vld [vmem:[%s1437 + $0x18] sm:$0xf]
  %v1445 = vld [vmem:[%s1437 + $0x1c] sm:$0xf]
  %v1446 = vld [vmem:[%s1437 + $0x20] sm:$0xf]
  %v1447 = vld [vmem:[%s1437 + $0x24] sm:$0xf]
  %v1448 = vld [vmem:[%s1437 + $0x28] sm:$0xf]
  %v1449 = vld [vmem:[%s1437 + $0x2c] sm:$0xf]
  %v1450 = vld [vmem:[%s1437 + $0x30] sm:$0xf]
  %v1451 = vld [vmem:[%s1437 + $0x34] sm:$0xf]
  %v1452 = vld [vmem:[%s1437 + $0x38] sm:$0xf]
  %v1453 = vld [vmem:[%s1437 + $0x3c] sm:$0xf]
  %v1470 = vunpack.c.l.b16 %v1438
  %v1471 = vunpack.c.l.b16 %v1439
  %v1472 = vunpack.c.l.b16 %v1440
  %v1473 = vunpack.c.l.b16 %v1441
  %v1474 = vunpack.c.l.b16 %v1442
  %v1475 = vunpack.c.l.b16 %v1443
  %v1476 = vunpack.c.l.b16 %v1444
  %v1477 = vunpack.c.l.b16 %v1445
  %v1478 = vunpack.c.l.b16 %v1446
  %v1479 = vunpack.c.l.b16 %v1447
  %v1480 = vunpack.c.l.b16 %v1448
  %v1481 = vunpack.c.l.b16 %v1449
  %v1482 = vunpack.c.l.b16 %v1450
  %v1483 = vunpack.c.l.b16 %v1451
  %v1484 = vunpack.c.l.b16 %v1452
  %v1485 = vunpack.c.l.b16 %v1453
  %v1486 = vpack.c.b16 %v1471, %v1470
  %v1487 = vpack.c.b16 %v1473, %v1472
  %v1488 = vpack.c.b16 %v1475, %v1474
  %v1489 = vpack.c.b16 %v1477, %v1476
  %v1490 = vpack.c.b16 %v1479, %v1478
  %v1491 = vpack.c.b16 %v1481, %v1480
  %v1492 = vpack.c.b16 %v1483, %v1482
  %v1493 = vpack.c.b16 %v1485, %v1484
  %1502 = vmatprep.subr.bf16.mxu0 0
  %1503 = vmatpush1.bf16.msra.mxu0 %v1486
  %1504 = vmatprep.subr.bf16.mxu0 0
  %1505 = vmatpush1.bf16.msra.mxu0 %v1487
  %1506 = vmatprep.subr.bf16.mxu0 0
  %1507 = vmatpush1.bf16.msra.mxu0 %v1488
  %1508 = vmatprep.subr.bf16.mxu0 0
  %1509 = vmatpush1.bf16.msra.mxu0 %v1489
  %1510 = vmatprep.subr.bf16.mxu0 0
  %1511 = vmatpush1.bf16.msra.mxu0 %v1490
  %1512 = vmatprep.subr.bf16.mxu0 0
  %1513 = vmatpush1.bf16.msra.mxu0 %v1491
  %1514 = vmatprep.subr.bf16.mxu0 0
  %1515 = vmatpush1.bf16.msra.mxu0 %v1492
  %1516 = vmatprep.subr.bf16.mxu0 0
  %1517 = vmatpush1.bf16.msra.mxu0 %v1493
  %1518 = vmatprep.subr.bf16.mxu0 0
  %1519 = vmatpush1.bf16.msra.mxu0 0
  %1520 = vmatprep.subr.bf16.mxu0 0
  %1521 = vmatpush1.bf16.msra.mxu0 0
  %1522 = vmatprep.subr.bf16.mxu0 0
  %1523 = vmatpush1.bf16.msra.mxu0 0
  %1524 = vmatprep.subr.bf16.mxu0 0
  %1525 = vmatpush1.bf16.msra.mxu0 0
  %1526 = vmatprep.subr.bf16.mxu0 0
  %1527 = vmatpush1.bf16.msra.mxu0 0
  %1528 = vmatprep.subr.bf16.mxu0 0
  %1529 = vmatpush1.bf16.msra.mxu0 0
  %1530 = vmatprep.subr.bf16.mxu0 0
  %1531 = vmatpush1.bf16.msra.mxu0 0
  %1532 = vmatprep.subr.bf16.mxu0 0
  %1533 = vmatpush1.bf16.msra.mxu0 0
  %1534 = vmatprep.mubr.bf16.mxu0 0
  %1535 = vmatmul.mubr.bf16.gmra.mrb[0].mxu0 %v1305
  %v1536 = vpop.f32.mrb[0].mxu0
  %v1537 = vadd.f32 0.0, %v1536
  %v1538 = vpop.f32.mrb[0].mxu0
  %v1539 = vpop.f32.mrb[0].mxu0
  %v1540 = vadd.f32 0.0, %v1539
  %v1541 = vpop.f32.mrb[0].mxu0
  %1542 = vmatprep.mubr.bf16.mxu0 0
  %1543 = vmatmul.mubr.bf16.gmra.mrb[0].mxu0 %v1306
  %v1544 = vpop.f32.mrb[0].mxu0
  %v1545 = vadd.f32 0.0, %v1544
  %v1546 = vpop.f32.mrb[0].mxu0
  %v1547 = vpop.f32.mrb[0].mxu0
  %v1548 = vadd.f32 0.0, %v1547
  %v1549 = vpop.f32.mrb[0].mxu0
  %1550 = vdwg.mxu0
  %v1551 = vrot.slane %v1406, 7
  %v1552 = vrot.slane %v1409, 7
  %v1553 = vrot.slane %v1414, 7
  %v1554 = vrot.slane %v1417, 7
  %v1555 = vsel %vm532, %v1553, %v1554
  %v1556 = vsel %vm532, %v1552, %v1553
  %v1557 = vsel %vm532, %v1551, %v1552
  %v1558 = vsel %vm532, %v1554, %v1551
  %v1559 = vmul.f32 %v1558, %v540
  %v1560 = vmul.f32 %v1557, %v545
  %v1561 = vmul.f32 %v1556, %v550
  %v1562 = vmul.f32 %v1555, %v555
  %v1579 = vunpack.c.l.b16 %v1421
  %v1580 = vunpack.c.l.b16 %v1422
  %v1581 = vunpack.c.l.b16 %v1423
  %v1582 = vunpack.c.l.b16 %v1424
  %v1583 = vunpack.c.l.b16 %v1425
  %v1584 = vunpack.c.l.b16 %v1426
  %v1585 = vunpack.c.l.b16 %v1427
  %v1586 = vunpack.c.l.b16 %v1428
  %v1587 = vunpack.c.l.b16 %v1429
  %v1588 = vunpack.c.l.b16 %v1430
  %v1589 = vunpack.c.l.b16 %v1431
  %v1590 = vunpack.c.l.b16 %v1432
  %v1591 = vunpack.c.l.b16 %v1433
  %v1592 = vunpack.c.l.b16 %v1434
  %v1593 = vunpack.c.l.b16 %v1435
  %v1594 = vunpack.c.l.b16 %v1436
  %v1595 = vpack.c.b16 %v1580, %v1579
  %v1596 = vpack.c.b16 %v1582, %v1581
  %v1597 = vpack.c.b16 %v1584, %v1583
  %v1598 = vpack.c.b16 %v1586, %v1585
  %v1599 = vpack.c.b16 %v1588, %v1587
  %v1600 = vpack.c.b16 %v1590, %v1589
  %v1601 = vpack.c.b16 %v1592, %v1591
  %v1602 = vpack.c.b16 %v1594, %v1593
  %1611 = vmatprep.subr.bf16.mxu0 0
  %1612 = vmatpush1.bf16.msra.mxu0 %v1595
  %1613 = vmatprep.subr.bf16.mxu0 0
  %1614 = vmatpush1.bf16.msra.mxu0 %v1596
  %1615 = vmatprep.subr.bf16.mxu0 0
  %1616 = vmatpush1.bf16.msra.mxu0 %v1597
  %1617 = vmatprep.subr.bf16.mxu0 0
  %1618 = vmatpush1.bf16.msra.mxu0 %v1598
  %1619 = vmatprep.subr.bf16.mxu0 0
  %1620 = vmatpush1.bf16.msra.mxu0 %v1599
  %1621 = vmatprep.subr.bf16.mxu0 0
  %1622 = vmatpush1.bf16.msra.mxu0 %v1600
  %1623 = vmatprep.subr.bf16.mxu0 0
  %1624 = vmatpush1.bf16.msra.mxu0 %v1601
  %1625 = vmatprep.subr.bf16.mxu0 0
  %1626 = vmatpush1.bf16.msra.mxu0 %v1602
  %1627 = vmatprep.subr.bf16.mxu0 0
  %1628 = vmatpush1.bf16.msra.mxu0 0
  %1629 = vmatprep.subr.bf16.mxu0 0
  %1630 = vmatpush1.bf16.msra.mxu0 0
  %1631 = vmatprep.subr.bf16.mxu0 0
  %1632 = vmatpush1.bf16.msra.mxu0 0
  %1633 = vmatprep.subr.bf16.mxu0 0
  %1634 = vmatpush1.bf16.msra.mxu0 0
  %1635 = vmatprep.subr.bf16.mxu0 0
  %1636 = vmatpush1.bf16.msra.mxu0 0
  %1637 = vmatprep.subr.bf16.mxu0 0
  %1638 = vmatpush1.bf16.msra.mxu0 0
  %1639 = vmatprep.subr.bf16.mxu0 0
  %1640 = vmatpush1.bf16.msra.mxu0 0
  %1641 = vmatprep.subr.bf16.mxu0 0
  %1642 = vmatpush1.bf16.msra.mxu0 0
  %1643 = vmatprep.mubr.bf16.mxu0 0
  %1644 = vmatmul.mubr.bf16.gmra.mrb[0].mxu0 %v1305
  %v1645 = vpop.f32.mrb[0].mxu0
  %v1646 = vadd.f32 %v1559, %v1645
  %v1647 = vpop.f32.mrb[0].mxu0
  %v1648 = vpop.f32.mrb[0].mxu0
  %v1649 = vadd.f32 %v1560, %v1648
  %v1650 = vpop.f32.mrb[0].mxu0
  %1651 = vmatprep.mubr.bf16.mxu0 0
  %1652 = vmatmul.mubr.bf16.gmra.mrb[0].mxu0 %v1306
  %v1653 = vpop.f32.mrb[0].mxu0
  %v1654 = vadd.f32 %v1561, %v1653
  %v1655 = vpop.f32.mrb[0].mxu0
  %v1656 = vpop.f32.mrb[0].mxu0
  %v1657 = vadd.f32 %v1562, %v1656
  %v1658 = vpop.f32.mrb[0].mxu0
  %1659 = vdwg.mxu0
  %v1660 = vrot.slane %v1537, 1
  %v1661 = vrot.slane %v1540, 1
  %v1662 = vrot.slane %v1545, 1
  %v1663 = vrot.slane %v1548, 1
  %v1664 = vsel %vm662, %v1662, %v1663
  %v1665 = vsel %vm662, %v1661, %v1662
  %v1666 = vsel %vm662, %v1660, %v1661
  %v1667 = vsel %vm662, %v1663, %v1660
  %v1668 = vmul.f32 %v1666, %v670
  %v1669 = vmul.f32 %v1665, %v675
  %v1670 = vmul.f32 %v1664, %v680
  %v1671 = vmul.f32 %v1667, %v685
  %v1672 = vadd.f32 %v1646, %v1668
  %v1673 = vadd.f32 %v1649, %v1669
  %v1674 = vadd.f32 %v1654, %v1670
  %v1675 = vadd.f32 %v1657, %v1671
  %v1676 = vld [vmem:[%s14] sm:$0x1]
  %v1678 = vlaneseq
  %v1679 = vshrl.u32 %v1678, 7
  %v1680 = vsub.s32 0, %v1679
  %v1681 = vrot.slane %v1676, %v1680
  %v1683 = vadd.f32 %v1672, %v1681
  %v1684 = vadd.f32 %v1673, %v1681
  %v1685 = vadd.f32 %v1674, %v1681
  %v1686 = vadd.f32 %v1675, %v1681
  %v1687 = vadd.f32 %v1683, %v1301
  %v1688 = vadd.f32 %v1684, %v1302
  %v1689 = vadd.f32 %v1685, %v1303
  %v1690 = vadd.f32 %v1686, %v1304
  %1691 = vst [vmem:[%s15] sm:$0xff] %v1687
  %1692 = vst [vmem:[%s15 + $0x8] sm:$0xff] %v1688
  %1693 = vst [vmem:[%s15 + $0x10] sm:$0xff] %v1689
  %1694 = vst [vmem:[%s15 + $0x18] sm:$0xff] %v1690
  // Predicated region
  $region62: #{forward.1} parent=0 // pred_check
    _
  $region63: #{forward.1} parent=0 // pred_check_branch
    %1696 = sbr.rel (0) target = $region65
  $region64: #{forward.1} parent=0 // pred_region
    _
  $region65: #{forward.1} parent=0 // pred_fallthru
    _
  // Predicated region
  $region66: #{forward.1} parent=0 // pred_check
    _
  $region67: #{forward.1} parent=0 // pred_check_branch
    %1698 = sbr.rel (0) target = $region69
  $region68: #{forward.1} parent=0 // pred_region
    _
  $region69: #{forward.1} parent=0 // pred_fallthru
    _

</llo_original>
